<compile_context>
chip_gen: v6e
topology: v6e:2x2x1
jax: 0.10.0
libtpu: 0.0.40
codegen_flags: <defaults>
</compile_context>

<pallas_src>
import numpy as np
import jax
import jax.numpy as jnp
from jax import lax
from jax.experimental import pallas as pl
from jax.experimental.pallas import tpu as pltpu

# ---- model hyper-parameters (small, consistent with the forward pass) ------
EMB_DIM = 16
PROJ = 32          # out_proj_size
LIN = 32           # out_lin_size (must equal PROJ, see note above)
LABELS = 4         # label_size
VOCAB = 50
LEN1 = 8
LEN2 = 8
BATCH = 2
ROWS = BATCH * (LEN1 + LEN2)          # all token rows of the batch (premise then hypothesis)


# ---------------------------- Pallas kernel ---------------------------------
def _dot(a, b):
    return jnp.dot(a, b, preferred_element_type=jnp.float32)


def _softmax_lastdim(x):
    m = jnp.max(x, axis=-1, keepdims=True)
    e = jnp.exp(x - m)
    inv = pl.reciprocal(jnp.sum(e, axis=-1, keepdims=True), approx=True)
    return e * inv


def decomp_attn_kernel(ids_ref, table_ref,
                       wp_ref, bp_ref,
                       wf1_ref, bf1_ref, wf2_ref, bf2_ref,
                       wg1a_ref, wg1b_ref, bg1_ref, wg2_ref, bg2_ref,
                       wh1a_ref, wh1b_ref, bh1_ref, wh2_ref, bh2_ref,
                       wo_ref, bo_ref,
                       out_ref):
    # ---- fused embedding lookup: one-hot(ids) @ table, all rows at once -----
    ids = ids_ref[...]                                              # (ROWS, 1) int32
    vocab_iota = lax.broadcasted_iota(jnp.int32, (ROWS, VOCAB), 1)
    onehot = (ids == vocab_iota).astype(jnp.float32)                # (ROWS, VOCAB)
    x = _dot(onehot, table_ref[...])                                # (ROWS, EMB_DIM)

    # ---- shared-weight layers: one tall matmul per layer --------------------
    s = _dot(x, wp_ref[...]) + bp_ref[...]                          # (ROWS, PROJ)
    f = jnp.maximum(_dot(s, wf1_ref[...]) + bf1_ref[...], 0.0)
    f = _dot(f, wf2_ref[...]) + bf2_ref[...]                        # (ROWS, LIN)

    # ---- per-example cross attention (unrolled; 8-row slices are sublane-
    #      group aligned for f32, so slicing is layout-clean) -----------------
    betas, alphas = [], []
    for b in range(BATCH):
        r1 = b * LEN1
        r2 = BATCH * LEN1 + b * LEN2
        s1, s2 = s[r1:r1 + LEN1], s[r2:r2 + LEN2]
        f1, f2 = f[r1:r1 + LEN1], f[r2:r2 + LEN2]
        score1 = lax.dot_general(f1, f2, (((1,), (1,)), ((), ())),
                                 preferred_element_type=jnp.float32)   # (LEN1, LEN2)
        # recompute reverse score on the MXU instead of an XLU transpose
        score2 = lax.dot_general(f2, f1, (((1,), (1,)), ((), ())),
                                 preferred_element_type=jnp.float32)   # (LEN2, LEN1)
        betas.append(_dot(_softmax_lastdim(score1), s2))               # (LEN1, PROJ)
        alphas.append(_dot(_softmax_lastdim(score2), s1))              # (LEN2, PROJ)
    att = jnp.concatenate(betas + alphas, axis=0)                      # (ROWS, PROJ)

    # ---- mlp_g on [s, att]: split weight rows instead of lane-axis concat ---
    gh = jnp.maximum(_dot(s, wg1a_ref[...]) + _dot(att, wg1b_ref[...])
                     + bg1_ref[...], 0.0)                              # (ROWS, 2*PROJ)
    g = _dot(gh, wg2_ref[...]) + bg2_ref[...]                          # (ROWS, LIN)

    # ---- per-(example, sentence) sums via selection matmuls (MXU) -----------
    r_idx = lax.broadcasted_iota(jnp.int32, (BATCH, ROWS), 1)
    b_idx = lax.broadcasted_iota(jnp.int32, (BATCH, ROWS), 0)
    sel1 = ((r_idx >= b_idx * LEN1) &
            (r_idx < (b_idx + 1) * LEN1)).astype(jnp.float32)          # premise rows
    off = BATCH * LEN1
    sel2 = ((r_idx >= off + b_idx * LEN2) &
            (r_idx < off + (b_idx + 1) * LEN2)).astype(jnp.float32)    # hypothesis rows
    v1 = _dot(sel1, g)                                                 # (BATCH, LIN)
    v2 = _dot(sel2, g)                                                 # (BATCH, LIN)

    # ---- mlp_h with split weight rows + final linear; single batched store --
    h = jnp.maximum(_dot(v1, wh1a_ref[...]) + _dot(v2, wh1b_ref[...])
                    + bh1_ref[...], 0.0)                               # (BATCH, 2*LIN)
    h = _dot(h, wh2_ref[...]) + bh2_ref[...]                           # (BATCH, LABELS)
    out_ref[...] = _dot(h, wo_ref[...]) + bo_ref[...]                  # (BATCH, LABELS)


# ------------------------------- wrapper -------------------------------------
def decomposable_attention(sent1, sent2, emb_table, params):
    """sent1: (B, LEN1) int32, sent2: (B, LEN2) int32 -> (B, LABELS) float32."""
    (wp, bp, wf1, bf1, wf2, bf2, wg1, bg1, wg2, bg2,
     wh1, bh1, wh2, bh2, wo, bo) = params
    B = sent1.shape[0]
    assert B == BATCH and sent1.shape[1] == LEN1 and sent2.shape[1] == LEN2

    # row layout: [premise b0..bB-1 (LEN1 rows each), hypothesis b0..bB-1]
    ids = jnp.concatenate([sent1.reshape(B * LEN1), sent2.reshape(B * LEN2)],
                          axis=0).astype(jnp.int32).reshape(ROWS, 1)

    kernel_inputs = (ids, emb_table,
                     wp, bp, wf1, bf1, wf2, bf2,
                     wg1[:PROJ], wg1[PROJ:], bg1, wg2, bg2,      # split mlp_g first layer
                     wh1[:LIN], wh1[LIN:], bh1, wh2, bh2,        # split mlp_h first layer
                     wo, bo)

    # every input is 2-D and delivered as one full block (single grid step)
    in_specs = [pl.BlockSpec(a.shape, lambda i: (0, 0)) for a in kernel_inputs]

    flops = 2 * (
        ROWS * VOCAB * EMB_DIM                               # one-hot embedding matmul
        + ROWS * EMB_DIM * PROJ                              # project_linear
        + ROWS * PROJ * PROJ + ROWS * PROJ * LIN             # mlp_f
        + BATCH * (2 * LEN1 * LEN2 * LIN + 2 * LEN1 * LEN2 * PROJ)   # attention
        + 2 * ROWS * PROJ * (2 * PROJ) + ROWS * (2 * PROJ) * LIN     # mlp_g
        + 2 * BATCH * ROWS * LIN                             # selection sums
        + BATCH * (2 * LIN * (2 * LIN) + 2 * LIN * LABELS)   # mlp_h
        + BATCH * LABELS * LABELS                            # final linear
    )
    bytes_accessed = int(sum(a.size * a.dtype.itemsize for a in kernel_inputs)
                         + B * LABELS * 4)
    cost = pl.CostEstimate(flops=int(flops),
                           transcendentals=2 * B * LEN1 * LEN2,
                           bytes_accessed=bytes_accessed)

    out = pl.pallas_call(
        decomp_attn_kernel,
        out_shape=jax.ShapeDtypeStruct((B, LABELS), jnp.float32),
        grid_spec=pltpu.PrefetchScalarGridSpec(
            num_scalar_prefetch=0,
            grid=(1,),                                   # whole batch in one step
            in_specs=in_specs,
            out_specs=pl.BlockSpec((B, LABELS), lambda i: (0, 0)),
        ),
        compiler_params=pltpu.CompilerParams(
            dimension_semantics=("arbitrary",)),
        cost_estimate=cost,
    )(*kernel_inputs)
    return out


# --------------------------- parameter setup ---------------------------------
def make_params(key):
    keys = jax.random.split(key, 17)

    def linear(kw, kb, fan_in, fan_out):
        # module re-inits weights ~ N(0, 0.01); biases keep PyTorch default
        # U(-1/sqrt(fan_in), 1/sqrt(fan_in)).  Stored as (in, out): x @ W + b.
        w = 0.01 * jax.random.normal(kw, (fan_in, fan_out), jnp.float32)
        bound = 1.0 / np.sqrt(fan_in)
        b = jax.random.uniform(kb, (1, fan_out), jnp.float32, -bound, bound)
        return w, b

    wp, bp = linear(keys[0], keys[1], EMB_DIM, PROJ)
    wf1, bf1 = linear(keys[2], keys[3], PROJ, PROJ)
    wf2, bf2 = linear(keys[4], keys[5], PROJ, LIN)
    wg1, bg1 = linear(keys[6], keys[7], 2 * PROJ, 2 * PROJ)
    wg2, bg2 = linear(keys[8], keys[9], 2 * PROJ, LIN)
    wh1, bh1 = linear(keys[10], keys[11], 2 * LIN, 2 * LIN)
    wh2, bh2 = linear(keys[12], keys[13], 2 * LIN, LABELS)
    wo, bo = linear(keys[14], keys[15], LABELS, LABELS)
    emb_table = jax.random.normal(keys[16], (VOCAB, EMB_DIM), jnp.float32)
    params = (wp, bp, wf1, bf1, wf2, bf2, wg1, bg1, wg2, bg2,
              wh1, bh1, wh2, bh2, wo, bo)
    return emb_table, params


# ---------------------------- numpy reference ---------------------------------
def reference_numpy(sent1, sent2, emb_table, params):
    p = [np.asarray(a, dtype=np.float64) for a in params]
    (wp, bp, wf1, bf1, wf2, bf2, wg1, bg1, wg2, bg2,
     wh1, bh1, wh2, bh2, wo, bo) = p
    table = np.asarray(emb_table, np.float64)
    e1 = table[np.asarray(sent1)]                       # (B, LEN1, EMB_DIM)
    e2 = table[np.asarray(sent2)]                       # (B, LEN2, EMB_DIM)

    def mlp(x, w1, b1, w2, b2):
        return np.maximum(x @ w1 + b1, 0.0) @ w2 + b2

    def softmax(x):
        m = x.max(-1, keepdims=True)
        e = np.exp(x - m)
        return e / e.sum(-1, keepdims=True)

    s1 = e1 @ wp + bp
    s2 = e2 @ wp + bp
    f1 = mlp(s1, wf1, bf1, wf2, bf2)
    f2 = mlp(s2, wf1, bf1, wf2, bf2)
    score1 = np.einsum('bik,bjk->bij', f1, f2)
    prob1 = softmax(score1)
    prob2 = softmax(np.transpose(score1, (0, 2, 1)))
    beta = prob1 @ s2
    alpha = prob2 @ s1
    g1 = mlp(np.concatenate([s1, beta], -1), wg1, bg1, wg2, bg2)
    g2 = mlp(np.concatenate([s2, alpha], -1), wg1, bg1, wg2, bg2)
    v = np.concatenate([g1.sum(1), g2.sum(1)], -1)
    h = mlp(v, wh1, bh1, wh2, bh2)
    return h @ wo + bo


# --------------------------------- main ---------------------------------------
if __name__ == "__main__":
    key = jax.random.PRNGKey(0)
    kp, k1, k2 = jax.random.split(key, 3)
    emb_table, params = make_params(kp)

    sent1 = jax.random.randint(k1, (BATCH, LEN1), 0, VOCAB, dtype=jnp.int32)
    sent2 = jax.random.randint(k2, (BATCH, LEN2), 0, VOCAB, dtype=jnp.int32)

    out = decomposable_attention(sent1, sent2, emb_table, params)
    out = jax.block_until_ready(out)
    assert out.shape == (BATCH, LABELS)

    ref = reference_numpy(sent1, sent2, emb_table, params)
    np.testing.assert_allclose(np.asarray(out, np.float64), ref,
                               rtol=1e-2, atol=1e-3)
    print("KERNEL_OK")
</pallas_src>

<mosaic_0001>
module attributes {stable_mosaic.version = 11 : i64} {
  func.func @decomp_attn_kernel(%arg0: i32, %arg1: memref<32x1xi32, #tpu.memory_space<vmem>>, %arg2: memref<50x16xf32, #tpu.memory_space<vmem>>, %arg3: memref<16x32xf32, #tpu.memory_space<vmem>>, %arg4: memref<1x32xf32, #tpu.memory_space<vmem>>, %arg5: memref<32x32xf32, #tpu.memory_space<vmem>>, %arg6: memref<1x32xf32, #tpu.memory_space<vmem>>, %arg7: memref<32x32xf32, #tpu.memory_space<vmem>>, %arg8: memref<1x32xf32, #tpu.memory_space<vmem>>, %arg9: memref<32x64xf32, #tpu.memory_space<vmem>>, %arg10: memref<32x64xf32, #tpu.memory_space<vmem>>, %arg11: memref<1x64xf32, #tpu.memory_space<vmem>>, %arg12: memref<64x32xf32, #tpu.memory_space<vmem>>, %arg13: memref<1x32xf32, #tpu.memory_space<vmem>>, %arg14: memref<32x64xf32, #tpu.memory_space<vmem>>, %arg15: memref<32x64xf32, #tpu.memory_space<vmem>>, %arg16: memref<1x64xf32, #tpu.memory_space<vmem>>, %arg17: memref<64x4xf32, #tpu.memory_space<vmem>>, %arg18: memref<1x4xf32, #tpu.memory_space<vmem>>, %arg19: memref<4x4xf32, #tpu.memory_space<vmem>>, %arg20: memref<1x4xf32, #tpu.memory_space<vmem>>, %arg21: memref<2x4xf32, #tpu.memory_space<vmem>>) attributes {dimension_semantics = [#tpu.dimension_semantics<arbitrary>], iteration_bounds = array<i64: 1>, scalar_prefetch = 0 : i64, scratch_operands = 0 : i64, tpu.core_type = #tpu.core_type<tc>, window_params = [{pipeline_mode = #tpu.pipeline_mode<synchronous>, transform_indices = @transform_0, window_bounds = array<i64: 32, 1>}, {pipeline_mode = #tpu.pipeline_mode<synchronous>, transform_indices = @transform_1, window_bounds = array<i64: 50, 16>}, {pipeline_mode = #tpu.pipeline_mode<synchronous>, transform_indices = @transform_2, window_bounds = array<i64: 16, 32>}, {pipeline_mode = #tpu.pipeline_mode<synchronous>, transform_indices = @transform_3, window_bounds = array<i64: 1, 32>}, {pipeline_mode = #tpu.pipeline_mode<synchronous>, transform_indices = @transform_4, window_bounds = array<i64: 32, 32>}, {pipeline_mode = #tpu.pipeline_mode<synchronous>, transform_indices = @transform_5, window_bounds = array<i64: 1, 32>}, {pipeline_mode = #tpu.pipeline_mode<synchronous>, transform_indices = @transform_6, window_bounds = array<i64: 32, 32>}, {pipeline_mode = #tpu.pipeline_mode<synchronous>, transform_indices = @transform_7, window_bounds = array<i64: 1, 32>}, {pipeline_mode = #tpu.pipeline_mode<synchronous>, transform_indices = @transform_8, window_bounds = array<i64: 32, 64>}, {pipeline_mode = #tpu.pipeline_mode<synchronous>, transform_indices = @transform_9, window_bounds = array<i64: 32, 64>}, {pipeline_mode = #tpu.pipeline_mode<synchronous>, transform_indices = @transform_10, window_bounds = array<i64: 1, 64>}, {pipeline_mode = #tpu.pipeline_mode<synchronous>, transform_indices = @transform_11, window_bounds = array<i64: 64, 32>}, {pipeline_mode = #tpu.pipeline_mode<synchronous>, transform_indices = @transform_12, window_bounds = array<i64: 1, 32>}, {pipeline_mode = #tpu.pipeline_mode<synchronous>, transform_indices = @transform_13, window_bounds = array<i64: 32, 64>}, {pipeline_mode = #tpu.pipeline_mode<synchronous>, transform_indices = @transform_14, window_bounds = array<i64: 32, 64>}, {pipeline_mode = #tpu.pipeline_mode<synchronous>, transform_indices = @transform_15, window_bounds = array<i64: 1, 64>}, {pipeline_mode = #tpu.pipeline_mode<synchronous>, transform_indices = @transform_16, window_bounds = array<i64: 64, 4>}, {pipeline_mode = #tpu.pipeline_mode<synchronous>, transform_indices = @transform_17, window_bounds = array<i64: 1, 4>}, {pipeline_mode = #tpu.pipeline_mode<synchronous>, transform_indices = @transform_18, window_bounds = array<i64: 4, 4>}, {pipeline_mode = #tpu.pipeline_mode<synchronous>, transform_indices = @transform_19, window_bounds = array<i64: 1, 4>}, {pipeline_mode = #tpu.pipeline_mode<synchronous>, transform_indices = @transform_20, window_bounds = array<i64: 2, 4>}]} {
    %c0 = arith.constant 0 : index
    %c0_0 = arith.constant 0 : index
    %0 = vector.load %arg1[%c0, %c0_0] : memref<32x1xi32, #tpu.memory_space<vmem>>, vector<32x1xi32>
    %1 = tpu.iota {dimensions = array<i32: 1>} : vector<32x50xi32>
    %2 = vector.broadcast %0 : vector<32x1xi32> to vector<32x50xi32>
    %3 = arith.cmpi eq, %2, %1 : vector<32x50xi32>
    %4 = arith.extui %3 : vector<32x50xi1> to vector<32x50xi32>
    %5 = arith.sitofp %4 : vector<32x50xi32> to vector<32x50xf32>
    %c0_1 = arith.constant 0 : index
    %c0_2 = arith.constant 0 : index
    %6 = vector.load %arg2[%c0_1, %c0_2] : memref<50x16xf32, #tpu.memory_space<vmem>>, vector<50x16xf32>
    %cst = arith.constant dense<0.000000e+00> : vector<32x16xf32>
    %7 = tpu.matmul %5, %6, %cst {dimension_numbers = #tpu.dot_dimension_numbers<[1], [0], [0], [1], [0, 0, 1, 1], [], []>} : vector<32x50xf32>, vector<50x16xf32>, vector<32x16xf32> -> vector<32x16xf32>
    %c0_3 = arith.constant 0 : index
    %c0_4 = arith.constant 0 : index
    %8 = vector.load %arg3[%c0_3, %c0_4] : memref<16x32xf32, #tpu.memory_space<vmem>>, vector<16x32xf32>
    %cst_5 = arith.constant dense<0.000000e+00> : vector<32x32xf32>
    %9 = tpu.matmul %7, %8, %cst_5 {dimension_numbers = #tpu.dot_dimension_numbers<[1], [0], [0], [1], [0, 0, 1, 1], [], []>} : vector<32x16xf32>, vector<16x32xf32>, vector<32x32xf32> -> vector<32x32xf32>
    %c0_6 = arith.constant 0 : index
    %c0_7 = arith.constant 0 : index
    %10 = vector.load %arg4[%c0_6, %c0_7] : memref<1x32xf32, #tpu.memory_space<vmem>>, vector<1x32xf32>
    %11 = vector.broadcast %10 : vector<1x32xf32> to vector<32x32xf32>
    %12 = arith.addf %9, %11 : vector<32x32xf32>
    %c0_8 = arith.constant 0 : index
    %c0_9 = arith.constant 0 : index
    %13 = vector.load %arg5[%c0_8, %c0_9] : memref<32x32xf32, #tpu.memory_space<vmem>>, vector<32x32xf32>
    %cst_10 = arith.constant dense<0.000000e+00> : vector<32x32xf32>
    %14 = tpu.matmul %12, %13, %cst_10 {dimension_numbers = #tpu.dot_dimension_numbers<[1], [0], [0], [1], [0, 0, 1, 1], [], []>} : vector<32x32xf32>, vector<32x32xf32>, vector<32x32xf32> -> vector<32x32xf32>
    %c0_11 = arith.constant 0 : index
    %c0_12 = arith.constant 0 : index
    %15 = vector.load %arg6[%c0_11, %c0_12] : memref<1x32xf32, #tpu.memory_space<vmem>>, vector<1x32xf32>
    %16 = vector.broadcast %15 : vector<1x32xf32> to vector<32x32xf32>
    %17 = arith.addf %14, %16 : vector<32x32xf32>
    %cst_13 = arith.constant 0.000000e+00 : f32
    %18 = vector.broadcast %cst_13 : f32 to vector<32x32xf32>
    %19 = arith.maximumf %17, %18 : vector<32x32xf32>
    %c0_14 = arith.constant 0 : index
    %c0_15 = arith.constant 0 : index
    %20 = vector.load %arg7[%c0_14, %c0_15] : memref<32x32xf32, #tpu.memory_space<vmem>>, vector<32x32xf32>
    %cst_16 = arith.constant dense<0.000000e+00> : vector<32x32xf32>
    %21 = tpu.matmul %19, %20, %cst_16 {dimension_numbers = #tpu.dot_dimension_numbers<[1], [0], [0], [1], [0, 0, 1, 1], [], []>} : vector<32x32xf32>, vector<32x32xf32>, vector<32x32xf32> -> vector<32x32xf32>
    %c0_17 = arith.constant 0 : index
    %c0_18 = arith.constant 0 : index
    %22 = vector.load %arg8[%c0_17, %c0_18] : memref<1x32xf32, #tpu.memory_space<vmem>>, vector<1x32xf32>
    %23 = vector.broadcast %22 : vector<1x32xf32> to vector<32x32xf32>
    %24 = arith.addf %21, %23 : vector<32x32xf32>
    %25 = vector.extract_strided_slice %12 {offsets = [0, 0], sizes = [8, 32], strides = [1, 1]} : vector<32x32xf32> to vector<8x32xf32>
    %26 = vector.extract_strided_slice %12 {offsets = [16, 0], sizes = [8, 32], strides = [1, 1]} : vector<32x32xf32> to vector<8x32xf32>
    %27 = vector.extract_strided_slice %24 {offsets = [0, 0], sizes = [8, 32], strides = [1, 1]} : vector<32x32xf32> to vector<8x32xf32>
    %28 = vector.extract_strided_slice %24 {offsets = [16, 0], sizes = [8, 32], strides = [1, 1]} : vector<32x32xf32> to vector<8x32xf32>
    %cst_19 = arith.constant dense<0.000000e+00> : vector<8x8xf32>
    %29 = tpu.matmul %27, %28, %cst_19 {dimension_numbers = #tpu.dot_dimension_numbers<[1], [1], [0], [0], [0, 0, 1, 0], [], []>} : vector<8x32xf32>, vector<8x32xf32>, vector<8x8xf32> -> vector<8x8xf32>
    %cst_20 = arith.constant dense<0.000000e+00> : vector<8x8xf32>
    %30 = tpu.matmul %28, %27, %cst_20 {dimension_numbers = #tpu.dot_dimension_numbers<[1], [1], [0], [0], [0, 0, 1, 0], [], []>} : vector<8x32xf32>, vector<8x32xf32>, vector<8x8xf32> -> vector<8x8xf32>
    %cst_21 = arith.constant dense<0xFF800000> : vector<8xf32>
    %31 = vector.multi_reduction <maximumf>, %29, %cst_21 [1] : vector<8x8xf32> to vector<8xf32>
    %32 = vector.shape_cast %31 : vector<8xf32> to vector<8x1xf32>
    %33 = vector.broadcast %32 : vector<8x1xf32> to vector<8x8xf32>
    %34 = arith.subf %29, %33 : vector<8x8xf32>
    %35 = math.exp %34 : vector<8x8xf32>
    %cst_22 = arith.constant dense<0.000000e+00> : vector<8xf32>
    %36 = vector.multi_reduction <add>, %35, %cst_22 [1] : vector<8x8xf32> to vector<8xf32>
    %37 = vector.shape_cast %36 : vector<8xf32> to vector<8x1xf32>
    %38 = tpu.reciprocal %37 {approx = true} : vector<8x1xf32> -> vector<8x1xf32>
    %39 = vector.broadcast %38 : vector<8x1xf32> to vector<8x8xf32>
    %40 = arith.mulf %35, %39 : vector<8x8xf32>
    %cst_23 = arith.constant dense<0.000000e+00> : vector<8x32xf32>
    %41 = tpu.matmul %40, %26, %cst_23 {dimension_numbers = #tpu.dot_dimension_numbers<[1], [0], [0], [1], [0, 0, 1, 1], [], []>} : vector<8x8xf32>, vector<8x32xf32>, vector<8x32xf32> -> vector<8x32xf32>
    %cst_24 = arith.constant dense<0xFF800000> : vector<8xf32>
    %42 = vector.multi_reduction <maximumf>, %30, %cst_24 [1] : vector<8x8xf32> to vector<8xf32>
    %43 = vector.shape_cast %42 : vector<8xf32> to vector<8x1xf32>
    %44 = vector.broadcast %43 : vector<8x1xf32> to vector<8x8xf32>
    %45 = arith.subf %30, %44 : vector<8x8xf32>
    %46 = math.exp %45 : vector<8x8xf32>
    %cst_25 = arith.constant dense<0.000000e+00> : vector<8xf32>
    %47 = vector.multi_reduction <add>, %46, %cst_25 [1] : vector<8x8xf32> to vector<8xf32>
    %48 = vector.shape_cast %47 : vector<8xf32> to vector<8x1xf32>
    %49 = tpu.reciprocal %48 {approx = true} : vector<8x1xf32> -> vector<8x1xf32>
    %50 = vector.broadcast %49 : vector<8x1xf32> to vector<8x8xf32>
    %51 = arith.mulf %46, %50 : vector<8x8xf32>
    %cst_26 = arith.constant dense<0.000000e+00> : vector<8x32xf32>
    %52 = tpu.matmul %51, %25, %cst_26 {dimension_numbers = #tpu.dot_dimension_numbers<[1], [0], [0], [1], [0, 0, 1, 1], [], []>} : vector<8x8xf32>, vector<8x32xf32>, vector<8x32xf32> -> vector<8x32xf32>
    %53 = vector.extract_strided_slice %12 {offsets = [8, 0], sizes = [8, 32], strides = [1, 1]} : vector<32x32xf32> to vector<8x32xf32>
    %54 = vector.extract_strided_slice %12 {offsets = [24, 0], sizes = [8, 32], strides = [1, 1]} : vector<32x32xf32> to vector<8x32xf32>
    %55 = vector.extract_strided_slice %24 {offsets = [8, 0], sizes = [8, 32], strides = [1, 1]} : vector<32x32xf32> to vector<8x32xf32>
    %56 = vector.extract_strided_slice %24 {offsets = [24, 0], sizes = [8, 32], strides = [1, 1]} : vector<32x32xf32> to vector<8x32xf32>
    %cst_27 = arith.constant dense<0.000000e+00> : vector<8x8xf32>
    %57 = tpu.matmul %55, %56, %cst_27 {dimension_numbers = #tpu.dot_dimension_numbers<[1], [1], [0], [0], [0, 0, 1, 0], [], []>} : vector<8x32xf32>, vector<8x32xf32>, vector<8x8xf32> -> vector<8x8xf32>
    %cst_28 = arith.constant dense<0.000000e+00> : vector<8x8xf32>
    %58 = tpu.matmul %56, %55, %cst_28 {dimension_numbers = #tpu.dot_dimension_numbers<[1], [1], [0], [0], [0, 0, 1, 0], [], []>} : vector<8x32xf32>, vector<8x32xf32>, vector<8x8xf32> -> vector<8x8xf32>
    %cst_29 = arith.constant dense<0xFF800000> : vector<8xf32>
    %59 = vector.multi_reduction <maximumf>, %57, %cst_29 [1] : vector<8x8xf32> to vector<8xf32>
    %60 = vector.shape_cast %59 : vector<8xf32> to vector<8x1xf32>
    %61 = vector.broadcast %60 : vector<8x1xf32> to vector<8x8xf32>
    %62 = arith.subf %57, %61 : vector<8x8xf32>
    %63 = math.exp %62 : vector<8x8xf32>
    %cst_30 = arith.constant dense<0.000000e+00> : vector<8xf32>
    %64 = vector.multi_reduction <add>, %63, %cst_30 [1] : vector<8x8xf32> to vector<8xf32>
    %65 = vector.shape_cast %64 : vector<8xf32> to vector<8x1xf32>
    %66 = tpu.reciprocal %65 {approx = true} : vector<8x1xf32> -> vector<8x1xf32>
    %67 = vector.broadcast %66 : vector<8x1xf32> to vector<8x8xf32>
    %68 = arith.mulf %63, %67 : vector<8x8xf32>
    %cst_31 = arith.constant dense<0.000000e+00> : vector<8x32xf32>
    %69 = tpu.matmul %68, %54, %cst_31 {dimension_numbers = #tpu.dot_dimension_numbers<[1], [0], [0], [1], [0, 0, 1, 1], [], []>} : vector<8x8xf32>, vector<8x32xf32>, vector<8x32xf32> -> vector<8x32xf32>
    %cst_32 = arith.constant dense<0xFF800000> : vector<8xf32>
    %70 = vector.multi_reduction <maximumf>, %58, %cst_32 [1] : vector<8x8xf32> to vector<8xf32>
    %71 = vector.shape_cast %70 : vector<8xf32> to vector<8x1xf32>
    %72 = vector.broadcast %71 : vector<8x1xf32> to vector<8x8xf32>
    %73 = arith.subf %58, %72 : vector<8x8xf32>
    %74 = math.exp %73 : vector<8x8xf32>
    %cst_33 = arith.constant dense<0.000000e+00> : vector<8xf32>
    %75 = vector.multi_reduction <add>, %74, %cst_33 [1] : vector<8x8xf32> to vector<8xf32>
    %76 = vector.shape_cast %75 : vector<8xf32> to vector<8x1xf32>
    %77 = tpu.reciprocal %76 {approx = true} : vector<8x1xf32> -> vector<8x1xf32>
    %78 = vector.broadcast %77 : vector<8x1xf32> to vector<8x8xf32>
    %79 = arith.mulf %74, %78 : vector<8x8xf32>
    %cst_34 = arith.constant dense<0.000000e+00> : vector<8x32xf32>
    %80 = tpu.matmul %79, %53, %cst_34 {dimension_numbers = #tpu.dot_dimension_numbers<[1], [0], [0], [1], [0, 0, 1, 1], [], []>} : vector<8x8xf32>, vector<8x32xf32>, vector<8x32xf32> -> vector<8x32xf32>
    %81 = tpu.concatenate %41, %69, %52, %80 in 0 : vector<8x32xf32>, vector<8x32xf32>, vector<8x32xf32>, vector<8x32xf32> -> vector<32x32xf32>
    %c0_35 = arith.constant 0 : index
    %c0_36 = arith.constant 0 : index
    %82 = vector.load %arg9[%c0_35, %c0_36] : memref<32x64xf32, #tpu.memory_space<vmem>>, vector<32x64xf32>
    %cst_37 = arith.constant dense<0.000000e+00> : vector<32x64xf32>
    %83 = tpu.matmul %12, %82, %cst_37 {dimension_numbers = #tpu.dot_dimension_numbers<[1], [0], [0], [1], [0, 0, 1, 1], [], []>} : vector<32x32xf32>, vector<32x64xf32>, vector<32x64xf32> -> vector<32x64xf32>
    %c0_38 = arith.constant 0 : index
    %c0_39 = arith.constant 0 : index
    %84 = vector.load %arg10[%c0_38, %c0_39] : memref<32x64xf32, #tpu.memory_space<vmem>>, vector<32x64xf32>
    %cst_40 = arith.constant dense<0.000000e+00> : vector<32x64xf32>
    %85 = tpu.matmul %81, %84, %cst_40 {dimension_numbers = #tpu.dot_dimension_numbers<[1], [0], [0], [1], [0, 0, 1, 1], [], []>} : vector<32x32xf32>, vector<32x64xf32>, vector<32x64xf32> -> vector<32x64xf32>
    %86 = arith.addf %83, %85 : vector<32x64xf32>
    %c0_41 = arith.constant 0 : index
    %c0_42 = arith.constant 0 : index
    %87 = vector.load %arg11[%c0_41, %c0_42] : memref<1x64xf32, #tpu.memory_space<vmem>>, vector<1x64xf32>
    %88 = vector.broadcast %87 : vector<1x64xf32> to vector<32x64xf32>
    %89 = arith.addf %86, %88 : vector<32x64xf32>
    %cst_43 = arith.constant 0.000000e+00 : f32
    %90 = vector.broadcast %cst_43 : f32 to vector<32x64xf32>
    %91 = arith.maximumf %89, %90 : vector<32x64xf32>
    %c0_44 = arith.constant 0 : index
    %c0_45 = arith.constant 0 : index
    %92 = vector.load %arg12[%c0_44, %c0_45] : memref<64x32xf32, #tpu.memory_space<vmem>>, vector<64x32xf32>
    %cst_46 = arith.constant dense<0.000000e+00> : vector<32x32xf32>
    %93 = tpu.matmul %91, %92, %cst_46 {dimension_numbers = #tpu.dot_dimension_numbers<[1], [0], [0], [1], [0, 0, 1, 1], [], []>} : vector<32x64xf32>, vector<64x32xf32>, vector<32x32xf32> -> vector<32x32xf32>
    %c0_47 = arith.constant 0 : index
    %c0_48 = arith.constant 0 : index
    %94 = vector.load %arg13[%c0_47, %c0_48] : memref<1x32xf32, #tpu.memory_space<vmem>>, vector<1x32xf32>
    %95 = vector.broadcast %94 : vector<1x32xf32> to vector<32x32xf32>
    %96 = arith.addf %93, %95 : vector<32x32xf32>
    %97 = tpu.iota {dimensions = array<i32: 1>} : vector<2x32xi32>
    %98 = tpu.iota {dimensions = array<i32: 0>} : vector<2x32xi32>
    %c8_i32 = arith.constant 8 : i32
    %99 = vector.broadcast %c8_i32 : i32 to vector<2x32xi32>
    %100 = arith.muli %98, %99 : vector<2x32xi32>
    %101 = arith.cmpi sge, %97, %100 : vector<2x32xi32>
    %c1_i32 = arith.constant 1 : i32
    %102 = vector.broadcast %c1_i32 : i32 to vector<2x32xi32>
    %103 = arith.addi %98, %102 : vector<2x32xi32>
    %c8_i32_49 = arith.constant 8 : i32
    %104 = vector.broadcast %c8_i32_49 : i32 to vector<2x32xi32>
    %105 = arith.muli %103, %104 : vector<2x32xi32>
    %106 = arith.cmpi slt, %97, %105 : vector<2x32xi32>
    %107 = arith.andi %101, %106 : vector<2x32xi1>
    %108 = arith.extui %107 : vector<2x32xi1> to vector<2x32xi32>
    %109 = arith.sitofp %108 : vector<2x32xi32> to vector<2x32xf32>
    %c8_i32_50 = arith.constant 8 : i32
    %110 = vector.broadcast %c8_i32_50 : i32 to vector<2x32xi32>
    %111 = arith.muli %98, %110 : vector<2x32xi32>
    %c16_i32 = arith.constant 16 : i32
    %112 = vector.broadcast %c16_i32 : i32 to vector<2x32xi32>
    %113 = arith.addi %112, %111 : vector<2x32xi32>
    %114 = arith.cmpi sge, %97, %113 : vector<2x32xi32>
    %c1_i32_51 = arith.constant 1 : i32
    %115 = vector.broadcast %c1_i32_51 : i32 to vector<2x32xi32>
    %116 = arith.addi %98, %115 : vector<2x32xi32>
    %c8_i32_52 = arith.constant 8 : i32
    %117 = vector.broadcast %c8_i32_52 : i32 to vector<2x32xi32>
    %118 = arith.muli %116, %117 : vector<2x32xi32>
    %c16_i32_53 = arith.constant 16 : i32
    %119 = vector.broadcast %c16_i32_53 : i32 to vector<2x32xi32>
    %120 = arith.addi %119, %118 : vector<2x32xi32>
    %121 = arith.cmpi slt, %97, %120 : vector<2x32xi32>
    %122 = arith.andi %114, %121 : vector<2x32xi1>
    %123 = arith.extui %122 : vector<2x32xi1> to vector<2x32xi32>
    %124 = arith.sitofp %123 : vector<2x32xi32> to vector<2x32xf32>
    %cst_54 = arith.constant dense<0.000000e+00> : vector<2x32xf32>
    %125 = tpu.matmul %109, %96, %cst_54 {dimension_numbers = #tpu.dot_dimension_numbers<[1], [0], [0], [1], [0, 0, 1, 1], [], []>} : vector<2x32xf32>, vector<32x32xf32>, vector<2x32xf32> -> vector<2x32xf32>
    %cst_55 = arith.constant dense<0.000000e+00> : vector<2x32xf32>
    %126 = tpu.matmul %124, %96, %cst_55 {dimension_numbers = #tpu.dot_dimension_numbers<[1], [0], [0], [1], [0, 0, 1, 1], [], []>} : vector<2x32xf32>, vector<32x32xf32>, vector<2x32xf32> -> vector<2x32xf32>
    %c0_56 = arith.constant 0 : index
    %c0_57 = arith.constant 0 : index
    %127 = vector.load %arg14[%c0_56, %c0_57] : memref<32x64xf32, #tpu.memory_space<vmem>>, vector<32x64xf32>
    %cst_58 = arith.constant dense<0.000000e+00> : vector<2x64xf32>
    %128 = tpu.matmul %125, %127, %cst_58 {dimension_numbers = #tpu.dot_dimension_numbers<[1], [0], [0], [1], [0, 0, 1, 1], [], []>} : vector<2x32xf32>, vector<32x64xf32>, vector<2x64xf32> -> vector<2x64xf32>
    %c0_59 = arith.constant 0 : index
    %c0_60 = arith.constant 0 : index
    %129 = vector.load %arg15[%c0_59, %c0_60] : memref<32x64xf32, #tpu.memory_space<vmem>>, vector<32x64xf32>
    %cst_61 = arith.constant dense<0.000000e+00> : vector<2x64xf32>
    %130 = tpu.matmul %126, %129, %cst_61 {dimension_numbers = #tpu.dot_dimension_numbers<[1], [0], [0], [1], [0, 0, 1, 1], [], []>} : vector<2x32xf32>, vector<32x64xf32>, vector<2x64xf32> -> vector<2x64xf32>
    %131 = arith.addf %128, %130 : vector<2x64xf32>
    %c0_62 = arith.constant 0 : index
    %c0_63 = arith.constant 0 : index
    %132 = vector.load %arg16[%c0_62, %c0_63] : memref<1x64xf32, #tpu.memory_space<vmem>>, vector<1x64xf32>
    %133 = vector.broadcast %132 : vector<1x64xf32> to vector<2x64xf32>
    %134 = arith.addf %131, %133 : vector<2x64xf32>
    %cst_64 = arith.constant 0.000000e+00 : f32
    %135 = vector.broadcast %cst_64 : f32 to vector<2x64xf32>
    %136 = arith.maximumf %134, %135 : vector<2x64xf32>
    %c0_65 = arith.constant 0 : index
    %c0_66 = arith.constant 0 : index
    %137 = vector.load %arg17[%c0_65, %c0_66] : memref<64x4xf32, #tpu.memory_space<vmem>>, vector<64x4xf32>
    %cst_67 = arith.constant dense<0.000000e+00> : vector<2x4xf32>
    %138 = tpu.matmul %136, %137, %cst_67 {dimension_numbers = #tpu.dot_dimension_numbers<[1], [0], [0], [1], [0, 0, 1, 1], [], []>} : vector<2x64xf32>, vector<64x4xf32>, vector<2x4xf32> -> vector<2x4xf32>
    %c0_68 = arith.constant 0 : index
    %c0_69 = arith.constant 0 : index
    %139 = vector.load %arg18[%c0_68, %c0_69] : memref<1x4xf32, #tpu.memory_space<vmem>>, vector<1x4xf32>
    %140 = vector.broadcast %139 : vector<1x4xf32> to vector<2x4xf32>
    %141 = arith.addf %138, %140 : vector<2x4xf32>
    %c0_70 = arith.constant 0 : index
    %c0_71 = arith.constant 0 : index
    %142 = vector.load %arg19[%c0_70, %c0_71] : memref<4x4xf32, #tpu.memory_space<vmem>>, vector<4x4xf32>
    %cst_72 = arith.constant dense<0.000000e+00> : vector<2x4xf32>
    %143 = tpu.matmul %141, %142, %cst_72 {dimension_numbers = #tpu.dot_dimension_numbers<[1], [0], [0], [1], [0, 0, 1, 1], [], []>} : vector<2x4xf32>, vector<4x4xf32>, vector<2x4xf32> -> vector<2x4xf32>
    %c0_73 = arith.constant 0 : index
    %c0_74 = arith.constant 0 : index
    %144 = vector.load %arg20[%c0_73, %c0_74] : memref<1x4xf32, #tpu.memory_space<vmem>>, vector<1x4xf32>
    %145 = vector.broadcast %144 : vector<1x4xf32> to vector<2x4xf32>
    %146 = arith.addf %143, %145 : vector<2x4xf32>
    %c0_75 = arith.constant 0 : index
    %c0_76 = arith.constant 0 : index
    %147 = vector.load %arg21[%c0_75, %c0_76] : memref<2x4xf32, #tpu.memory_space<vmem>>, vector<2x4xf32>
    tpu.vector_store %arg21[%c0_75, %c0_76], %146 {strides = array<i32>} : memref<2x4xf32, #tpu.memory_space<vmem>>, vector<2x4xf32>,
    return
  }
  func.func @transform_0(%arg0: i32) -> (i32, i32) {
    %c0_i32 = arith.constant 0 : i32
    %c0_i32_0 = arith.constant 0 : i32
    %c0_i32_1 = arith.constant 0 : i32
    return %c0_i32, %c0_i32_0 : i32, i32
  }
  func.func @transform_1(%arg0: i32) -> (i32, i32) {
    %c0_i32 = arith.constant 0 : i32
    %c0_i32_0 = arith.constant 0 : i32
    %c0_i32_1 = arith.constant 0 : i32
    return %c0_i32, %c0_i32_0 : i32, i32
  }
  func.func @transform_2(%arg0: i32) -> (i32, i32) {
    %c0_i32 = arith.constant 0 : i32
    %c0_i32_0 = arith.constant 0 : i32
    %c0_i32_1 = arith.constant 0 : i32
    return %c0_i32, %c0_i32_0 : i32, i32
  }
  func.func @transform_3(%arg0: i32) -> (i32, i32) {
    %c0_i32 = arith.constant 0 : i32
    %c0_i32_0 = arith.constant 0 : i32
    %c0_i32_1 = arith.constant 0 : i32
    return %c0_i32, %c0_i32_0 : i32, i32
  }
  func.func @transform_4(%arg0: i32) -> (i32, i32) {
    %c0_i32 = arith.constant 0 : i32
    %c0_i32_0 = arith.constant 0 : i32
    %c0_i32_1 = arith.constant 0 : i32
    return %c0_i32, %c0_i32_0 : i32, i32
  }
  func.func @transform_5(%arg0: i32) -> (i32, i32) {
    %c0_i32 = arith.constant 0 : i32
    %c0_i32_0 = arith.constant 0 : i32
    %c0_i32_1 = arith.constant 0 : i32
    return %c0_i32, %c0_i32_0 : i32, i32
  }
  func.func @transform_6(%arg0: i32) -> (i32, i32) {
    %c0_i32 = arith.constant 0 : i32
    %c0_i32_0 = arith.constant 0 : i32
    %c0_i32_1 = arith.constant 0 : i32
    return %c0_i32, %c0_i32_0 : i32, i32
  }
  func.func @transform_7(%arg0: i32) -> (i32, i32) {
    %c0_i32 = arith.constant 0 : i32
    %c0_i32_0 = arith.constant 0 : i32
    %c0_i32_1 = arith.constant 0 : i32
    return %c0_i32, %c0_i32_0 : i32, i32
  }
  func.func @transform_8(%arg0: i32) -> (i32, i32) {
    %c0_i32 = arith.constant 0 : i32
    %c0_i32_0 = arith.constant 0 : i32
    %c0_i32_1 = arith.constant 0 : i32
    return %c0_i32, %c0_i32_0 : i32, i32
  }
  func.func @transform_9(%arg0: i32) -> (i32, i32) {
    %c0_i32 = arith.constant 0 : i32
    %c0_i32_0 = arith.constant 0 : i32
    %c0_i32_1 = arith.constant 0 : i32
    return %c0_i32, %c0_i32_0 : i32, i32
  }
  func.func @transform_10(%arg0: i32) -> (i32, i32) {
    %c0_i32 = arith.constant 0 : i32
    %c0_i32_0 = arith.constant 0 : i32
    %c0_i32_1 = arith.constant 0 : i32
    return %c0_i32, %c0_i32_0 : i32, i32
  }
  func.func @transform_11(%arg0: i32) -> (i32, i32) {
    %c0_i32 = arith.constant 0 : i32
    %c0_i32_0 = arith.constant 0 : i32
    %c0_i32_1 = arith.constant 0 : i32
    return %c0_i32, %c0_i32_0 : i32, i32
  }
  func.func @transform_12(%arg0: i32) -> (i32, i32) {
    %c0_i32 = arith.constant 0 : i32
    %c0_i32_0 = arith.constant 0 : i32
    %c0_i32_1 = arith.constant 0 : i32
    return %c0_i32, %c0_i32_0 : i32, i32
  }
  func.func @transform_13(%arg0: i32) -> (i32, i32) {
    %c0_i32 = arith.constant 0 : i32
    %c0_i32_0 = arith.constant 0 : i32
    %c0_i32_1 = arith.constant 0 : i32
    return %c0_i32, %c0_i32_0 : i32, i32
  }
  func.func @transform_14(%arg0: i32) -> (i32, i32) {
    %c0_i32 = arith.constant 0 : i32
    %c0_i32_0 = arith.constant 0 : i32
    %c0_i32_1 = arith.constant 0 : i32
    return %c0_i32, %c0_i32_0 : i32, i32
  }
  func.func @transform_15(%arg0: i32) -> (i32, i32) {
    %c0_i32 = arith.constant 0 : i32
    %c0_i32_0 = arith.constant 0 : i32
    %c0_i32_1 = arith.constant 0 : i32
    return %c0_i32, %c0_i32_0 : i32, i32
  }
  func.func @transform_16(%arg0: i32) -> (i32, i32) {
    %c0_i32 = arith.constant 0 : i32
    %c0_i32_0 = arith.constant 0 : i32
    %c0_i32_1 = arith.constant 0 : i32
    return %c0_i32, %c0_i32_0 : i32, i32
  }
  func.func @transform_17(%arg0: i32) -> (i32, i32) {
    %c0_i32 = arith.constant 0 : i32
    %c0_i32_0 = arith.constant 0 : i32
    %c0_i32_1 = arith.constant 0 : i32
    return %c0_i32, %c0_i32_0 : i32, i32
  }
  func.func @transform_18(%arg0: i32) -> (i32, i32) {
    %c0_i32 = arith.constant 0 : i32
    %c0_i32_0 = arith.constant 0 : i32
    %c0_i32_1 = arith.constant 0 : i32
    return %c0_i32, %c0_i32_0 : i32, i32
  }
  func.func @transform_19(%arg0: i32) -> (i32, i32) {
    %c0_i32 = arith.constant 0 : i32
    %c0_i32_0 = arith.constant 0 : i32
    %c0_i32_1 = arith.constant 0 : i32
    return %c0_i32, %c0_i32_0 : i32, i32
  }
  func.func @transform_20(%arg0: i32) -> (i32, i32) {
    %c0_i32 = arith.constant 0 : i32
    %c0_i32_0 = arith.constant 0 : i32
    %c0_i32_1 = arith.constant 0 : i32
    return %c0_i32, %c0_i32_0 : i32, i32
  }
}

</mosaic_0001>

<llo_original>
// kernel: tpu_custom_call.1
$region0: #{tpu_custom_call.1}
  #allocation0 [shape = 'u32[]', space=smem, size = 0x4, offset = 0x4, fixed_abs, tag = 'smem constant byte address 0x4 - core index']
  #allocation1 [shape = 'u32[144,128]{1,0:T(1,128)}', space=vmem, size = 0x12000, scoped, tag = 'internal scratch']
  %s0 = inlined_call_operand.vmem [shape: s32[32,1], index: 0, kind: input, shape index: {}]
  %s1 = inlined_call_operand.vmem [shape: f32[50,16], index: 1, kind: input, shape index: {}]
  %s2 = inlined_call_operand.vmem [shape: f32[16,32], index: 2, kind: input, shape index: {}]
  %s3 = inlined_call_operand.vmem [shape: f32[1,32], index: 3, kind: input, shape index: {}]
  %s4 = inlined_call_operand.vmem [shape: f32[32,32], index: 4, kind: input, shape index: {}]
  %s5 = inlined_call_operand.vmem [shape: f32[1,32], index: 5, kind: input, shape index: {}]
  %s6 = inlined_call_operand.vmem [shape: f32[32,32], index: 6, kind: input, shape index: {}]
  %s7 = inlined_call_operand.vmem [shape: f32[1,32], index: 7, kind: input, shape index: {}]
  %s8 = inlined_call_operand.vmem [shape: f32[32,64], index: 8, kind: input, shape index: {}]
  %s9 = inlined_call_operand.vmem [shape: f32[32,64], index: 9, kind: input, shape index: {}]
  %s10 = inlined_call_operand.vmem [shape: f32[1,64], index: 10, kind: input, shape index: {}]
  %s11 = inlined_call_operand.vmem [shape: f32[64,32], index: 11, kind: input, shape index: {}]
  %s12 = inlined_call_operand.vmem [shape: f32[1,32], index: 12, kind: input, shape index: {}]
  %s13 = inlined_call_operand.vmem [shape: f32[32,64], index: 13, kind: input, shape index: {}]
  %s14 = inlined_call_operand.vmem [shape: f32[32,64], index: 14, kind: input, shape index: {}]
  %s15 = inlined_call_operand.vmem [shape: f32[1,64], index: 15, kind: input, shape index: {}]
  %s16 = inlined_call_operand.vmem [shape: f32[64,4], index: 16, kind: input, shape index: {}]
  %s17 = inlined_call_operand.vmem [shape: f32[1,4], index: 17, kind: input, shape index: {}]
  %s18 = inlined_call_operand.vmem [shape: f32[4,4], index: 18, kind: input, shape index: {}]
  %s19 = inlined_call_operand.vmem [shape: f32[1,4], index: 19, kind: input, shape index: {}]
  %s20 = inlined_call_operand.hbm [shape: f32[2,4], index: 20, kind: output, shape index: {}]
  %s21 = sld [smem:[#allocation0]]
  $region90: #{tpu_custom_call.1} parent=0
    _
  %s23 = ssub.s32 1, %s21
  %s24 = scalar_select 0, %s23, %s21
  $region1: #{tpu_custom_call.1} parent=0
    #allocation2 [shape = 'u8[1024]{0}', space=vmem, size = 0x400, scoped, tag = 'output window, operand 0, single buffered']
    #allocation3 [shape = 's32[1]{0}', space=sflag, size = 0x4, scoped, tag = 'scoped memory for tpu_custom_call.1']
    %25 = vsyncpa [#allocation3], 0
    // Predicated region
    $region2: #{tpu_custom_call.1} parent=1 // pred_check
      _
    $region3: #{tpu_custom_call.1} parent=1 // pred_check_branch
      %27 = sbr.rel (0) target = $region5
    $region4: #{tpu_custom_call.1} parent=1 // pred_region
      _
    $region5: #{tpu_custom_call.1} parent=1 // pred_fallthru
      _
    // Predicated region
    $region6: #{tpu_custom_call.1} parent=1 // pred_check
      _
    $region7: #{tpu_custom_call.1} parent=1 // pred_check_branch
      %29 = sbr.rel (0) target = $region9
    $region8: #{tpu_custom_call.1} parent=1 // pred_region
      _
    $region9: #{tpu_custom_call.1} parent=1 // pred_fallthru
      _
    // Predicated region
    $region10: #{tpu_custom_call.1} parent=1 // pred_check
      _
    $region11: #{tpu_custom_call.1} parent=1 // pred_check_branch
      %31 = sbr.rel (0) target = $region13
    $region12: #{tpu_custom_call.1} parent=1 // pred_region
      _
    $region13: #{tpu_custom_call.1} parent=1 // pred_fallthru
      _
    // Predicated region
    $region14: #{tpu_custom_call.1} parent=1 // pred_check
      _
    $region15: #{tpu_custom_call.1} parent=1 // pred_check_branch
      %33 = sbr.rel (0) target = $region17
    $region16: #{tpu_custom_call.1} parent=1 // pred_region
      _
    $region17: #{tpu_custom_call.1} parent=1 // pred_fallthru
      _
    // Predicated region
    $region18: #{tpu_custom_call.1} parent=1 // pred_check
      _
    $region19: #{tpu_custom_call.1} parent=1 // pred_check_branch
      %35 = sbr.rel (0) target = $region21
    $region20: #{tpu_custom_call.1} parent=1 // pred_region
      _
    $region21: #{tpu_custom_call.1} parent=1 // pred_fallthru
      _
    // Predicated region
    $region22: #{tpu_custom_call.1} parent=1 // pred_check
      _
    $region23: #{tpu_custom_call.1} parent=1 // pred_check_branch
      %37 = sbr.rel (0) target = $region25
    $region24: #{tpu_custom_call.1} parent=1 // pred_region
      _
    $region25: #{tpu_custom_call.1} parent=1 // pred_fallthru
      _
    // Predicated region
    $region26: #{tpu_custom_call.1} parent=1 // pred_check
      _
    $region27: #{tpu_custom_call.1} parent=1 // pred_check_branch
      %39 = sbr.rel (0) target = $region29
    $region28: #{tpu_custom_call.1} parent=1 // pred_region
      _
    $region29: #{tpu_custom_call.1} parent=1 // pred_fallthru
      _
    // Predicated region
    $region30: #{tpu_custom_call.1} parent=1 // pred_check
      _
    $region31: #{tpu_custom_call.1} parent=1 // pred_check_branch
      %41 = sbr.rel (0) target = $region33
    $region32: #{tpu_custom_call.1} parent=1 // pred_region
      _
    $region33: #{tpu_custom_call.1} parent=1 // pred_fallthru
      _
    // Predicated region
    $region34: #{tpu_custom_call.1} parent=1 // pred_check
      _
    $region35: #{tpu_custom_call.1} parent=1 // pred_check_branch
      %43 = sbr.rel (0) target = $region37
    $region36: #{tpu_custom_call.1} parent=1 // pred_region
      _
    $region37: #{tpu_custom_call.1} parent=1 // pred_fallthru
      _
    // Predicated region
    $region38: #{tpu_custom_call.1} parent=1 // pred_check
      _
    $region39: #{tpu_custom_call.1} parent=1 // pred_check_branch
      %45 = sbr.rel (0) target = $region41
    $region40: #{tpu_custom_call.1} parent=1 // pred_region
      _
    $region41: #{tpu_custom_call.1} parent=1 // pred_fallthru
      _
    // Predicated region
    $region42: #{tpu_custom_call.1} parent=1 // pred_check
      _
    $region43: #{tpu_custom_call.1} parent=1 // pred_check_branch
      %47 = sbr.rel (0) target = $region45
    $region44: #{tpu_custom_call.1} parent=1 // pred_region
      _
    $region45: #{tpu_custom_call.1} parent=1 // pred_fallthru
      _
    // Predicated region
    $region46: #{tpu_custom_call.1} parent=1 // pred_check
      _
    $region47: #{tpu_custom_call.1} parent=1 // pred_check_branch
      %49 = sbr.rel (0) target = $region49
    $region48: #{tpu_custom_call.1} parent=1 // pred_region
      _
    $region49: #{tpu_custom_call.1} parent=1 // pred_fallthru
      _
    // Predicated region
    $region50: #{tpu_custom_call.1} parent=1 // pred_check
      _
    $region51: #{tpu_custom_call.1} parent=1 // pred_check_branch
      %51 = sbr.rel (0) target = $region53
    $region52: #{tpu_custom_call.1} parent=1 // pred_region
      _
    $region53: #{tpu_custom_call.1} parent=1 // pred_fallthru
      _
    // Predicated region
    $region54: #{tpu_custom_call.1} parent=1 // pred_check
      _
    $region55: #{tpu_custom_call.1} parent=1 // pred_check_branch
      %53 = sbr.rel (0) target = $region57
    $region56: #{tpu_custom_call.1} parent=1 // pred_region
      _
    $region57: #{tpu_custom_call.1} parent=1 // pred_fallthru
      _
    // Predicated region
    $region58: #{tpu_custom_call.1} parent=1 // pred_check
      _
    $region59: #{tpu_custom_call.1} parent=1 // pred_check_branch
      %55 = sbr.rel (0) target = $region61
    $region60: #{tpu_custom_call.1} parent=1 // pred_region
      _
    $region61: #{tpu_custom_call.1} parent=1 // pred_fallthru
      _
    // Predicated region
    $region62: #{tpu_custom_call.1} parent=1 // pred_check
      _
    $region63: #{tpu_custom_call.1} parent=1 // pred_check_branch
      %57 = sbr.rel (0) target = $region65
    $region64: #{tpu_custom_call.1} parent=1 // pred_region
      _
    $region65: #{tpu_custom_call.1} parent=1 // pred_fallthru
      _
    // Predicated region
    $region66: #{tpu_custom_call.1} parent=1 // pred_check
      _
    $region67: #{tpu_custom_call.1} parent=1 // pred_check_branch
      %59 = sbr.rel (0) target = $region69
    $region68: #{tpu_custom_call.1} parent=1 // pred_region
      _
    $region69: #{tpu_custom_call.1} parent=1 // pred_fallthru
      _
    // Predicated region
    $region70: #{tpu_custom_call.1} parent=1 // pred_check
      _
    $region71: #{tpu_custom_call.1} parent=1 // pred_check_branch
      %61 = sbr.rel (0) target = $region73
    $region72: #{tpu_custom_call.1} parent=1 // pred_region
      _
    $region73: #{tpu_custom_call.1} parent=1 // pred_fallthru
      _
    // Predicated region
    $region74: #{tpu_custom_call.1} parent=1 // pred_check
      _
    $region75: #{tpu_custom_call.1} parent=1 // pred_check_branch
      %63 = sbr.rel (0) target = $region77
    $region76: #{tpu_custom_call.1} parent=1 // pred_region
      _
    $region77: #{tpu_custom_call.1} parent=1 // pred_fallthru
      _
    // Predicated region
    $region78: #{tpu_custom_call.1} parent=1 // pred_check
      _
    $region79: #{tpu_custom_call.1} parent=1 // pred_check_branch
      %65 = sbr.rel (0) target = $region81
    $region80: #{tpu_custom_call.1} parent=1 // pred_region
      _
    $region81: #{tpu_custom_call.1} parent=1 // pred_fallthru
      _
    %v66 = vld [vmem:[%s0] sm:$0xff]
    %v67 = vld [vmem:[%s0 + $0x8] sm:$0xff]
    %v68 = vld [vmem:[%s0 + $0x10] sm:$0xff]
    %v69 = vld [vmem:[%s0 + $0x18] sm:$0xff]
    %v70 = vlaneseq
    %v71 = vand.u32 %v70, 127
    %72 = vset.pattern.permute.xlu0 0
    %73 = vperm.xlu0 %72, %v66
    %v74 = vpop.permute.xlu0 %73
    %75 = vset.pattern.permute.xlu0 0
    %76 = vperm.xlu0 %75, %v67
    %v77 = vpop.permute.xlu0 %76
    %78 = vset.pattern.permute.xlu0 0
    %79 = vperm.xlu0 %78, %v68
    %v80 = vpop.permute.xlu0 %79
    %81 = vset.pattern.permute.xlu0 0
    %82 = vperm.xlu0 %81, %v69
    %v83 = vpop.permute.xlu0 %82
    %vm84 = vcmp.eq.s32.totalorder %v74, %v71
    %vm85 = vcmp.eq.s32.totalorder %v77, %v71
    %vm86 = vcmp.eq.s32.totalorder %v80, %v71
    %vm87 = vcmp.eq.s32.totalorder %v83, %v71
    %v88 = vsel %vm84, 1, 0
    %v89 = vsel %vm85, 1, 0
    %v90 = vsel %vm86, 1, 0
    %v91 = vsel %vm87, 1, 0
    %v92 = vcvt.s32.f32 %v88
    %v93 = vcvt.s32.f32 %v89
    %v94 = vcvt.s32.f32 %v90
    %v95 = vcvt.s32.f32 %v91
    %v96 = vld [vmem:[%s1] sm:$0xff]
    %v97 = vld [vmem:[%s1 + $0x8] sm:$0xff]
    %v98 = vld [vmem:[%s1 + $0x10] sm:$0xff]
    %v99 = vld [vmem:[%s1 + $0x18] sm:$0xff]
    %v100 = vld [vmem:[%s1 + $0x20] sm:$0xff]
    %v101 = vld [vmem:[%s1 + $0x28] sm:$0xff]
    %v102 = vld [vmem:[%s1 + $0x30] sm:$0x3]
    %vm103 = vcmask 408576
    %v105 = vsel %vm103, %v92, 0
    %v108 = vsel %vm103, %v93, 0
    %v111 = vsel %vm103, %v94, 0
    %v114 = vsel %vm103, %v95, 0
    %vm116 = vcmask 1041408
    %v118 = vsel %vm116, %v102, 0
    %120 = vmatprep.subr.mxu0 0.0
    %121 = vmatpush1.msra.mxu0 0.0
    %122 = vmatprep.subr.mxu0 0.0
    %123 = vmatpush1.msra.mxu0 0.0
    %124 = vmatprep.subr.mxu0 0.0
    %125 = vmatpush1.msra.mxu0 0.0
    %126 = vmatprep.subr.mxu0 0.0
    %127 = vmatpush1.msra.mxu0 0.0
    %128 = vmatprep.subr.mxu0 0.0
    %129 = vmatpush1.msra.mxu0 0.0
    %130 = vmatprep.subr.mxu0 0.0
    %131 = vmatpush1.msra.mxu0 0.0
    %132 = vmatprep.subr.mxu0 0.0
    %133 = vmatpush1.msra.mxu0 0.0
    %134 = vmatprep.subr.mxu0 0.0
    %135 = vmatpush1.msra.mxu0 0.0
    %136 = vmatprep.subr.mxu0 0.0
    %137 = vmatpush1.msra.mxu0 0.0
    %138 = vmatprep.subr.mxu0 0.0
    %139 = vmatpush1.msra.mxu0 %v118
    %140 = vmatprep.subr.mxu0 0.0
    %141 = vmatpush1.msra.mxu0 %v101
    %142 = vmatprep.subr.mxu0 0.0
    %143 = vmatpush1.msra.mxu0 %v100
    %144 = vmatprep.subr.mxu0 0.0
    %145 = vmatpush1.msra.mxu0 %v99
    %146 = vmatprep.subr.mxu0 0.0
    %147 = vmatpush1.msra.mxu0 %v98
    %148 = vmatprep.subr.mxu0 0.0
    %149 = vmatpush1.msra.mxu0 %v97
    %150 = vmatprep.subr.mxu0 0.0
    %151 = vmatpush1.msra.mxu0 %v96
    %152 = vmatprep.subr.mxu0 0.0
    %153 = vmatpush2.msra.mxu0 0.0
    %154 = vmatprep.subr.mxu0 0.0
    %155 = vmatpush2.msra.mxu0 0.0
    %156 = vmatprep.subr.mxu0 0.0
    %157 = vmatpush2.msra.mxu0 0.0
    %158 = vmatprep.subr.mxu0 0.0
    %159 = vmatpush2.msra.mxu0 0.0
    %160 = vmatprep.subr.mxu0 0.0
    %161 = vmatpush2.msra.mxu0 0.0
    %162 = vmatprep.subr.mxu0 0.0
    %163 = vmatpush2.msra.mxu0 0.0
    %164 = vmatprep.subr.mxu0 0.0
    %165 = vmatpush2.msra.mxu0 0.0
    %166 = vmatprep.subr.mxu0 0.0
    %167 = vmatpush2.msra.mxu0 0.0
    %168 = vmatprep.subr.mxu0 0.0
    %169 = vmatpush2.msra.mxu0 0.0
    %170 = vmatprep.subr.mxu0 0.0
    %171 = vmatpush2.msra.mxu0 0.0
    %172 = vmatprep.subr.mxu0 0.0
    %173 = vmatpush2.msra.mxu0 0.0
    %174 = vmatprep.subr.mxu0 0.0
    %175 = vmatpush2.msra.mxu0 0.0
    %176 = vmatprep.subr.mxu0 0.0
    %177 = vmatpush2.msra.mxu0 0.0
    %178 = vmatprep.subr.mxu0 0.0
    %179 = vmatpush2.msra.mxu0 0.0
    %180 = vmatprep.subr.mxu0 0.0
    %181 = vmatpush2.msra.mxu0 0.0
    %182 = vmatprep.subr.mxu0 0.0
    %183 = vmatpush2.msra.mxu0 0.0
    %184 = vmatprep.mubr.f32.mxu0 0.0
    %185 = vmatmul.mubr.f32.gmra.mxu0 %v105
    %v186 = vpop.f32.mrf.mxu0
    %v187 = vadd.f32 0.0, %v186
    %v188 = vpop.f32.mrf.mxu0
    %189 = vmatprep.mubr.f32.mxu0 0.0
    %190 = vmatmul.mubr.f32.gmra.mxu0 %v108
    %v191 = vpop.f32.mrf.mxu0
    %v192 = vadd.f32 0.0, %v191
    %v193 = vpop.f32.mrf.mxu0
    %194 = vmatprep.mubr.f32.mxu0 0.0
    %195 = vmatmul.mubr.f32.gmra.mxu0 %v111
    %v196 = vpop.f32.mrf.mxu0
    %v197 = vadd.f32 0.0, %v196
    %v198 = vpop.f32.mrf.mxu0
    %199 = vmatprep.mubr.f32.mxu0 0.0
    %200 = vmatmul.mubr.f32.gmra.mxu0 %v114
    %v201 = vpop.f32.mrf.mxu0
    %v202 = vadd.f32 0.0, %v201
    %v203 = vpop.f32.mrf.mxu0
    %204 = vdwg.mxu0
    %v205 = vld [vmem:[%s2] sm:$0xff]
    %v206 = vld [vmem:[%s2 + $0x8] sm:$0xff]
    %v207 = vld [vmem:[%s3] sm:$0x1]
    %v209 = vlaneseq
    %v210 = vshrl.u32 %v209, 7
    %v211 = vsub.s32 0, %v210
    %v212 = vrot.slane %v207, %v211
    %vm214 = vcmask 130048
    %v216 = vsel %vm214, %v187, 0
    %v219 = vsel %vm214, %v192, 0
    %v222 = vsel %vm214, %v197, 0
    %v225 = vsel %vm214, %v202, 0
    %227 = vmatprep.subr.mxu0 0.0
    %228 = vmatpush1.msra.mxu0 0.0
    %229 = vmatprep.subr.mxu0 0.0
    %230 = vmatpush1.msra.mxu0 0.0
    %231 = vmatprep.subr.mxu0 0.0
    %232 = vmatpush1.msra.mxu0 0.0
    %233 = vmatprep.subr.mxu0 0.0
    %234 = vmatpush1.msra.mxu0 0.0
    %235 = vmatprep.subr.mxu0 0.0
    %236 = vmatpush1.msra.mxu0 0.0
    %237 = vmatprep.subr.mxu0 0.0
    %238 = vmatpush1.msra.mxu0 0.0
    %239 = vmatprep.subr.mxu0 0.0
    %240 = vmatpush1.msra.mxu0 0.0
    %241 = vmatprep.subr.mxu0 0.0
    %242 = vmatpush1.msra.mxu0 0.0
    %243 = vmatprep.subr.mxu0 0.0
    %244 = vmatpush1.msra.mxu0 0.0
    %245 = vmatprep.subr.mxu0 0.0
    %246 = vmatpush1.msra.mxu0 0.0
    %247 = vmatprep.subr.mxu0 0.0
    %248 = vmatpush1.msra.mxu0 0.0
    %249 = vmatprep.subr.mxu0 0.0
    %250 = vmatpush1.msra.mxu0 0.0
    %251 = vmatprep.subr.mxu0 0.0
    %252 = vmatpush1.msra.mxu0 0.0
    %253 = vmatprep.subr.mxu0 0.0
    %254 = vmatpush1.msra.mxu0 0.0
    %255 = vmatprep.subr.mxu0 0.0
    %256 = vmatpush1.msra.mxu0 %v206
    %257 = vmatprep.subr.mxu0 0.0
    %258 = vmatpush1.msra.mxu0 %v205
    %259 = vmatprep.subr.mxu0 0.0
    %260 = vmatpush2.msra.mxu0 0.0
    %261 = vmatprep.subr.mxu0 0.0
    %262 = vmatpush2.msra.mxu0 0.0
    %263 = vmatprep.subr.mxu0 0.0
    %264 = vmatpush2.msra.mxu0 0.0
    %265 = vmatprep.subr.mxu0 0.0
    %266 = vmatpush2.msra.mxu0 0.0
    %267 = vmatprep.subr.mxu0 0.0
    %268 = vmatpush2.msra.mxu0 0.0
    %269 = vmatprep.subr.mxu0 0.0
    %270 = vmatpush2.msra.mxu0 0.0
    %271 = vmatprep.subr.mxu0 0.0
    %272 = vmatpush2.msra.mxu0 0.0
    %273 = vmatprep.subr.mxu0 0.0
    %274 = vmatpush2.msra.mxu0 0.0
    %275 = vmatprep.subr.mxu0 0.0
    %276 = vmatpush2.msra.mxu0 0.0
    %277 = vmatprep.subr.mxu0 0.0
    %278 = vmatpush2.msra.mxu0 0.0
    %279 = vmatprep.subr.mxu0 0.0
    %280 = vmatpush2.msra.mxu0 0.0
    %281 = vmatprep.subr.mxu0 0.0
    %282 = vmatpush2.msra.mxu0 0.0
    %283 = vmatprep.subr.mxu0 0.0
    %284 = vmatpush2.msra.mxu0 0.0
    %285 = vmatprep.subr.mxu0 0.0
    %286 = vmatpush2.msra.mxu0 0.0
    %287 = vmatprep.subr.mxu0 0.0
    %288 = vmatpush2.msra.mxu0 0.0
    %289 = vmatprep.subr.mxu0 0.0
    %290 = vmatpush2.msra.mxu0 0.0
    %291 = vmatprep.mubr.f32.mxu0 0.0
    %292 = vmatmul.mubr.f32.gmra.mxu0 %v216
    %v293 = vpop.f32.mrf.mxu0
    %v294 = vadd.f32 %v212, %v293
    %v295 = vpop.f32.mrf.mxu0
    %296 = vmatprep.mubr.f32.mxu0 0.0
    %297 = vmatmul.mubr.f32.gmra.mxu0 %v219
    %v298 = vpop.f32.mrf.mxu0
    %v299 = vadd.f32 %v212, %v298
    %v300 = vpop.f32.mrf.mxu0
    %301 = vmatprep.mubr.f32.mxu0 0.0
    %302 = vmatmul.mubr.f32.gmra.mxu0 %v222
    %v303 = vpop.f32.mrf.mxu0
    %v304 = vadd.f32 %v212, %v303
    %v305 = vpop.f32.mrf.mxu0
    %306 = vmatprep.mubr.f32.mxu0 0.0
    %307 = vmatmul.mubr.f32.gmra.mxu0 %v225
    %v308 = vpop.f32.mrf.mxu0
    %v309 = vadd.f32 %v212, %v308
    %v310 = vpop.f32.mrf.mxu0
    %311 = vdwg.mxu0
    %v312 = vld [vmem:[%s4] sm:$0xff]
    %v313 = vld [vmem:[%s4 + $0x8] sm:$0xff]
    %v314 = vld [vmem:[%s4 + $0x10] sm:$0xff]
    %v315 = vld [vmem:[%s4 + $0x18] sm:$0xff]
    %v316 = vld [vmem:[%s5] sm:$0x1]
    %v318 = vlaneseq
    %v319 = vshrl.u32 %v318, 7
    %v320 = vsub.s32 0, %v319
    %v321 = vrot.slane %v316, %v320
    %vm323 = vcmask 261120
    %v325 = vsel %vm323, %v294, 0
    %v328 = vsel %vm323, %v299, 0
    %v331 = vsel %vm323, %v304, 0
    %v334 = vsel %vm323, %v309, 0
    %336 = vmatprep.subr.mxu0 0.0
    %337 = vmatpush1.msra.mxu0 0.0
    %338 = vmatprep.subr.mxu0 0.0
    %339 = vmatpush1.msra.mxu0 0.0
    %340 = vmatprep.subr.mxu0 0.0
    %341 = vmatpush1.msra.mxu0 0.0
    %342 = vmatprep.subr.mxu0 0.0
    %343 = vmatpush1.msra.mxu0 0.0
    %344 = vmatprep.subr.mxu0 0.0
    %345 = vmatpush1.msra.mxu0 0.0
    %346 = vmatprep.subr.mxu0 0.0
    %347 = vmatpush1.msra.mxu0 0.0
    %348 = vmatprep.subr.mxu0 0.0
    %349 = vmatpush1.msra.mxu0 0.0
    %350 = vmatprep.subr.mxu0 0.0
    %351 = vmatpush1.msra.mxu0 0.0
    %352 = vmatprep.subr.mxu0 0.0
    %353 = vmatpush1.msra.mxu0 0.0
    %354 = vmatprep.subr.mxu0 0.0
    %355 = vmatpush1.msra.mxu0 0.0
    %356 = vmatprep.subr.mxu0 0.0
    %357 = vmatpush1.msra.mxu0 0.0
    %358 = vmatprep.subr.mxu0 0.0
    %359 = vmatpush1.msra.mxu0 0.0
    %360 = vmatprep.subr.mxu0 0.0
    %361 = vmatpush1.msra.mxu0 %v315
    %362 = vmatprep.subr.mxu0 0.0
    %363 = vmatpush1.msra.mxu0 %v314
    %364 = vmatprep.subr.mxu0 0.0
    %365 = vmatpush1.msra.mxu0 %v313
    %366 = vmatprep.subr.mxu0 0.0
    %367 = vmatpush1.msra.mxu0 %v312
    %368 = vmatprep.subr.mxu0 0.0
    %369 = vmatpush2.msra.mxu0 0.0
    %370 = vmatprep.subr.mxu0 0.0
    %371 = vmatpush2.msra.mxu0 0.0
    %372 = vmatprep.subr.mxu0 0.0
    %373 = vmatpush2.msra.mxu0 0.0
    %374 = vmatprep.subr.mxu0 0.0
    %375 = vmatpush2.msra.mxu0 0.0
    %376 = vmatprep.subr.mxu0 0.0
    %377 = vmatpush2.msra.mxu0 0.0
    %378 = vmatprep.subr.mxu0 0.0
    %379 = vmatpush2.msra.mxu0 0.0
    %380 = vmatprep.subr.mxu0 0.0
    %381 = vmatpush2.msra.mxu0 0.0
    %382 = vmatprep.subr.mxu0 0.0
    %383 = vmatpush2.msra.mxu0 0.0
    %384 = vmatprep.subr.mxu0 0.0
    %385 = vmatpush2.msra.mxu0 0.0
    %386 = vmatprep.subr.mxu0 0.0
    %387 = vmatpush2.msra.mxu0 0.0
    %388 = vmatprep.subr.mxu0 0.0
    %389 = vmatpush2.msra.mxu0 0.0
    %390 = vmatprep.subr.mxu0 0.0
    %391 = vmatpush2.msra.mxu0 0.0
    %392 = vmatprep.subr.mxu0 0.0
    %393 = vmatpush2.msra.mxu0 0.0
    %394 = vmatprep.subr.mxu0 0.0
    %395 = vmatpush2.msra.mxu0 0.0
    %396 = vmatprep.subr.mxu0 0.0
    %397 = vmatpush2.msra.mxu0 0.0
    %398 = vmatprep.subr.mxu0 0.0
    %399 = vmatpush2.msra.mxu0 0.0
    %400 = vmatprep.mubr.f32.mxu0 0.0
    %401 = vmatmul.mubr.f32.gmra.mxu0 %v325
    %v402 = vpop.f32.mrf.mxu0
    %v403 = vadd.f32 %v321, %v402
    %v404 = vpop.f32.mrf.mxu0
    %405 = vmatprep.mubr.f32.mxu0 0.0
    %406 = vmatmul.mubr.f32.gmra.mxu0 %v328
    %v407 = vpop.f32.mrf.mxu0
    %v408 = vadd.f32 %v321, %v407
    %v409 = vpop.f32.mrf.mxu0
    %410 = vmatprep.mubr.f32.mxu0 0.0
    %411 = vmatmul.mubr.f32.gmra.mxu0 %v331
    %v412 = vpop.f32.mrf.mxu0
    %v413 = vadd.f32 %v321, %v412
    %v414 = vpop.f32.mrf.mxu0
    %415 = vmatprep.mubr.f32.mxu0 0.0
    %416 = vmatmul.mubr.f32.gmra.mxu0 %v334
    %v417 = vpop.f32.mrf.mxu0
    %v418 = vadd.f32 %v321, %v417
    %v419 = vpop.f32.mrf.mxu0
    %420 = vdwg.mxu0
    %v421 = vmax.f32 %v403, 0.0
    %v422 = vmax.f32 %v408, 0.0
    %v423 = vmax.f32 %v413, 0.0
    %v424 = vmax.f32 %v418, 0.0
    %v425 = vld [vmem:[%s6] sm:$0xff]
    %v426 = vld [vmem:[%s6 + $0x8] sm:$0xff]
    %v427 = vld [vmem:[%s6 + $0x10] sm:$0xff]
    %v428 = vld [vmem:[%s6 + $0x18] sm:$0xff]
    %v429 = vld [vmem:[%s7] sm:$0x1]
    %v431 = vlaneseq
    %v432 = vshrl.u32 %v431, 7
    %v433 = vsub.s32 0, %v432
    %v434 = vrot.slane %v429, %v433
    %v437 = vsel %vm323, %v421, 0
    %v440 = vsel %vm323, %v422, 0
    %v443 = vsel %vm323, %v423, 0
    %v446 = vsel %vm323, %v424, 0
    %448 = vmatprep.subr.mxu0 0.0
    %449 = vmatpush1.msra.mxu0 0.0
    %450 = vmatprep.subr.mxu0 0.0
    %451 = vmatpush1.msra.mxu0 0.0
    %452 = vmatprep.subr.mxu0 0.0
    %453 = vmatpush1.msra.mxu0 0.0
    %454 = vmatprep.subr.mxu0 0.0
    %455 = vmatpush1.msra.mxu0 0.0
    %456 = vmatprep.subr.mxu0 0.0
    %457 = vmatpush1.msra.mxu0 0.0
    %458 = vmatprep.subr.mxu0 0.0
    %459 = vmatpush1.msra.mxu0 0.0
    %460 = vmatprep.subr.mxu0 0.0
    %461 = vmatpush1.msra.mxu0 0.0
    %462 = vmatprep.subr.mxu0 0.0
    %463 = vmatpush1.msra.mxu0 0.0
    %464 = vmatprep.subr.mxu0 0.0
    %465 = vmatpush1.msra.mxu0 0.0
    %466 = vmatprep.subr.mxu0 0.0
    %467 = vmatpush1.msra.mxu0 0.0
    %468 = vmatprep.subr.mxu0 0.0
    %469 = vmatpush1.msra.mxu0 0.0
    %470 = vmatprep.subr.mxu0 0.0
    %471 = vmatpush1.msra.mxu0 0.0
    %472 = vmatprep.subr.mxu0 0.0
    %473 = vmatpush1.msra.mxu0 %v428
    %474 = vmatprep.subr.mxu0 0.0
    %475 = vmatpush1.msra.mxu0 %v427
    %476 = vmatprep.subr.mxu0 0.0
    %477 = vmatpush1.msra.mxu0 %v426
    %478 = vmatprep.subr.mxu0 0.0
    %479 = vmatpush1.msra.mxu0 %v425
    %480 = vmatprep.subr.mxu0 0.0
    %481 = vmatpush2.msra.mxu0 0.0
    %482 = vmatprep.subr.mxu0 0.0
    %483 = vmatpush2.msra.mxu0 0.0
    %484 = vmatprep.subr.mxu0 0.0
    %485 = vmatpush2.msra.mxu0 0.0
    %486 = vmatprep.subr.mxu0 0.0
    %487 = vmatpush2.msra.mxu0 0.0
    %488 = vmatprep.subr.mxu0 0.0
    %489 = vmatpush2.msra.mxu0 0.0
    %490 = vmatprep.subr.mxu0 0.0
    %491 = vmatpush2.msra.mxu0 0.0
    %492 = vmatprep.subr.mxu0 0.0
    %493 = vmatpush2.msra.mxu0 0.0
    %494 = vmatprep.subr.mxu0 0.0
    %495 = vmatpush2.msra.mxu0 0.0
    %496 = vmatprep.subr.mxu0 0.0
    %497 = vmatpush2.msra.mxu0 0.0
    %498 = vmatprep.subr.mxu0 0.0
    %499 = vmatpush2.msra.mxu0 0.0
    %500 = vmatprep.subr.mxu0 0.0
    %501 = vmatpush2.msra.mxu0 0.0
    %502 = vmatprep.subr.mxu0 0.0
    %503 = vmatpush2.msra.mxu0 0.0
    %504 = vmatprep.subr.mxu0 0.0
    %505 = vmatpush2.msra.mxu0 0.0
    %506 = vmatprep.subr.mxu0 0.0
    %507 = vmatpush2.msra.mxu0 0.0
    %508 = vmatprep.subr.mxu0 0.0
    %509 = vmatpush2.msra.mxu0 0.0
    %510 = vmatprep.subr.mxu0 0.0
    %511 = vmatpush2.msra.mxu0 0.0
    %512 = vmatprep.mubr.f32.mxu0 0.0
    %513 = vmatmul.mubr.f32.gmra.mxu0 %v437
    %v514 = vpop.f32.mrf.mxu0
    %v515 = vadd.f32 %v434, %v514
    %v516 = vpop.f32.mrf.mxu0
    %517 = vmatprep.mubr.f32.mxu0 0.0
    %518 = vmatmul.mubr.f32.gmra.mxu0 %v440
    %v519 = vpop.f32.mrf.mxu0
    %v520 = vadd.f32 %v434, %v519
    %v521 = vpop.f32.mrf.mxu0
    %522 = vmatprep.mubr.f32.mxu0 0.0
    %523 = vmatmul.mubr.f32.gmra.mxu0 %v443
    %v524 = vpop.f32.mrf.mxu0
    %v525 = vadd.f32 %v434, %v524
    %v526 = vpop.f32.mrf.mxu0
    %527 = vmatprep.mubr.f32.mxu0 0.0
    %528 = vmatmul.mubr.f32.gmra.mxu0 %v446
    %v529 = vpop.f32.mrf.mxu0
    %v530 = vadd.f32 %v434, %v529
    %v531 = vpop.f32.mrf.mxu0
    %532 = vdwg.mxu0
    %v534 = vsel %vm323, %v515, 0
    %v537 = vsel %vm323, %v525, 0
    %539 = vmatprep.subr.mxu0 0.0
    %540 = vmatpush1.xpose.msra.mxu0 0.0
    %541 = vmatprep.subr.mxu0 0.0
    %542 = vmatpush1.xpose.msra.mxu0 0.0
    %543 = vmatprep.subr.mxu0 0.0
    %544 = vmatpush1.xpose.msra.mxu0 0.0
    %545 = vmatprep.subr.mxu0 0.0
    %546 = vmatpush1.xpose.msra.mxu0 0.0
    %547 = vmatprep.subr.mxu0 0.0
    %548 = vmatpush1.xpose.msra.mxu0 0.0
    %549 = vmatprep.subr.mxu0 0.0
    %550 = vmatpush1.xpose.msra.mxu0 0.0
    %551 = vmatprep.subr.mxu0 0.0
    %552 = vmatpush1.xpose.msra.mxu0 0.0
    %553 = vmatprep.subr.mxu0 0.0
    %554 = vmatpush1.xpose.msra.mxu0 0.0
    %555 = vmatprep.subr.mxu0 0.0
    %556 = vmatpush1.xpose.msra.mxu0 0.0
    %557 = vmatprep.subr.mxu0 0.0
    %558 = vmatpush1.xpose.msra.mxu0 0.0
    %559 = vmatprep.subr.mxu0 0.0
    %560 = vmatpush1.xpose.msra.mxu0 0.0
    %561 = vmatprep.subr.mxu0 0.0
    %562 = vmatpush1.xpose.msra.mxu0 0.0
    %563 = vmatprep.subr.mxu0 0.0
    %564 = vmatpush1.xpose.msra.mxu0 0.0
    %565 = vmatprep.subr.mxu0 0.0
    %566 = vmatpush1.xpose.msra.mxu0 0.0
    %567 = vmatprep.subr.mxu0 0.0
    %568 = vmatpush1.xpose.msra.mxu0 0.0
    %569 = vmatprep.subr.mxu0 0.0
    %570 = vmatpush1.xpose.msra.mxu0 %v537
    %571 = vmatprep.subr.mxu0 0.0
    %572 = vmatpush2.xpose.msra.mxu0 0.0
    %573 = vmatprep.subr.mxu0 0.0
    %574 = vmatpush2.xpose.msra.mxu0 0.0
    %575 = vmatprep.subr.mxu0 0.0
    %576 = vmatpush2.xpose.msra.mxu0 0.0
    %577 = vmatprep.subr.mxu0 0.0
    %578 = vmatpush2.xpose.msra.mxu0 0.0
    %579 = vmatprep.subr.mxu0 0.0
    %580 = vmatpush2.xpose.msra.mxu0 0.0
    %581 = vmatprep.subr.mxu0 0.0
    %582 = vmatpush2.xpose.msra.mxu0 0.0
    %583 = vmatprep.subr.mxu0 0.0
    %584 = vmatpush2.xpose.msra.mxu0 0.0
    %585 = vmatprep.subr.mxu0 0.0
    %586 = vmatpush2.xpose.msra.mxu0 0.0
    %587 = vmatprep.subr.mxu0 0.0
    %588 = vmatpush2.xpose.msra.mxu0 0.0
    %589 = vmatprep.subr.mxu0 0.0
    %590 = vmatpush2.xpose.msra.mxu0 0.0
    %591 = vmatprep.subr.mxu0 0.0
    %592 = vmatpush2.xpose.msra.mxu0 0.0
    %593 = vmatprep.subr.mxu0 0.0
    %594 = vmatpush2.xpose.msra.mxu0 0.0
    %595 = vmatprep.subr.mxu0 0.0
    %596 = vmatpush2.xpose.msra.mxu0 0.0
    %597 = vmatprep.subr.mxu0 0.0
    %598 = vmatpush2.xpose.msra.mxu0 0.0
    %599 = vmatprep.subr.mxu0 0.0
    %600 = vmatpush2.xpose.msra.mxu0 0.0
    %601 = vmatprep.subr.mxu0 0.0
    %602 = vmatpush2.xpose.msra.mxu0 0.0
    %603 = vmatprep.mubr.f32.mxu0 0.0
    %604 = vmatmul.mubr.f32.gmra.mxu0 %v534
    %v605 = vpop.f32.mrf.mxu0
    %v606 = vadd.f32 0.0, %v605
    %v607 = vpop.f32.mrf.mxu0
    %608 = vdwg.mxu0
    %609 = vmatprep.subr.mxu0 0.0
    %610 = vmatpush1.xpose.msra.mxu0 0.0
    %611 = vmatprep.subr.mxu0 0.0
    %612 = vmatpush1.xpose.msra.mxu0 0.0
    %613 = vmatprep.subr.mxu0 0.0
    %614 = vmatpush1.xpose.msra.mxu0 0.0
    %615 = vmatprep.subr.mxu0 0.0
    %616 = vmatpush1.xpose.msra.mxu0 0.0
    %617 = vmatprep.subr.mxu0 0.0
    %618 = vmatpush1.xpose.msra.mxu0 0.0
    %619 = vmatprep.subr.mxu0 0.0
    %620 = vmatpush1.xpose.msra.mxu0 0.0
    %621 = vmatprep.subr.mxu0 0.0
    %622 = vmatpush1.xpose.msra.mxu0 0.0
    %623 = vmatprep.subr.mxu0 0.0
    %624 = vmatpush1.xpose.msra.mxu0 0.0
    %625 = vmatprep.subr.mxu0 0.0
    %626 = vmatpush1.xpose.msra.mxu0 0.0
    %627 = vmatprep.subr.mxu0 0.0
    %628 = vmatpush1.xpose.msra.mxu0 0.0
    %629 = vmatprep.subr.mxu0 0.0
    %630 = vmatpush1.xpose.msra.mxu0 0.0
    %631 = vmatprep.subr.mxu0 0.0
    %632 = vmatpush1.xpose.msra.mxu0 0.0
    %633 = vmatprep.subr.mxu0 0.0
    %634 = vmatpush1.xpose.msra.mxu0 0.0
    %635 = vmatprep.subr.mxu0 0.0
    %636 = vmatpush1.xpose.msra.mxu0 0.0
    %637 = vmatprep.subr.mxu0 0.0
    %638 = vmatpush1.xpose.msra.mxu0 0.0
    %639 = vmatprep.subr.mxu0 0.0
    %640 = vmatpush1.xpose.msra.mxu0 %v534
    %641 = vmatprep.subr.mxu0 0.0
    %642 = vmatpush2.xpose.msra.mxu0 0.0
    %643 = vmatprep.subr.mxu0 0.0
    %644 = vmatpush2.xpose.msra.mxu0 0.0
    %645 = vmatprep.subr.mxu0 0.0
    %646 = vmatpush2.xpose.msra.mxu0 0.0
    %647 = vmatprep.subr.mxu0 0.0
    %648 = vmatpush2.xpose.msra.mxu0 0.0
    %649 = vmatprep.subr.mxu0 0.0
    %650 = vmatpush2.xpose.msra.mxu0 0.0
    %651 = vmatprep.subr.mxu0 0.0
    %652 = vmatpush2.xpose.msra.mxu0 0.0
    %653 = vmatprep.subr.mxu0 0.0
    %654 = vmatpush2.xpose.msra.mxu0 0.0
    %655 = vmatprep.subr.mxu0 0.0
    %656 = vmatpush2.xpose.msra.mxu0 0.0
    %657 = vmatprep.subr.mxu0 0.0
    %658 = vmatpush2.xpose.msra.mxu0 0.0
    %659 = vmatprep.subr.mxu0 0.0
    %660 = vmatpush2.xpose.msra.mxu0 0.0
    %661 = vmatprep.subr.mxu0 0.0
    %662 = vmatpush2.xpose.msra.mxu0 0.0
    %663 = vmatprep.subr.mxu0 0.0
    %664 = vmatpush2.xpose.msra.mxu0 0.0
    %665 = vmatprep.subr.mxu0 0.0
    %666 = vmatpush2.xpose.msra.mxu0 0.0
    %667 = vmatprep.subr.mxu0 0.0
    %668 = vmatpush2.xpose.msra.mxu0 0.0
    %669 = vmatprep.subr.mxu0 0.0
    %670 = vmatpush2.xpose.msra.mxu0 0.0
    %671 = vmatprep.subr.mxu0 0.0
    %672 = vmatpush2.xpose.msra.mxu0 0.0
    %673 = vmatprep.mubr.f32.mxu0 0.0
    %674 = vmatmul.mubr.f32.gmra.mxu0 %v537
    %v675 = vpop.f32.mrf.mxu0
    %v676 = vadd.f32 0.0, %v675
    %v677 = vpop.f32.mrf.mxu0
    %678 = vdwg.mxu0
    %vm679 = vcmask 64512
    %v680 = vsel %vm679, %v606, -inf
    %681 = vmax.xlane.f32.xlu0 %v680
    %v682 = vpop.xlane.xlu0 %681
    %v683 = vsub.f32 %v606, %v682
    %v684 = vmul.f32 %v683, 1.442695
    %v685 = vpow.pop %v684
    %v686 = vsel %vm679, %v685, 0.0
    %687 = vadd.xlane.f32.xlu0 %v686
    %v688 = vpop.xlane.xlu0 %687
    %v689 = vrcp.pop %v688
    %v690 = vmul.f32 %v685, %v689
    %v692 = vsel %vm679, %v690, 0
    %694 = vmatprep.subr.mxu0 0.0
    %695 = vmatpush1.msra.mxu0 0.0
    %696 = vmatprep.subr.mxu0 0.0
    %697 = vmatpush1.msra.mxu0 0.0
    %698 = vmatprep.subr.mxu0 0.0
    %699 = vmatpush1.msra.mxu0 0.0
    %700 = vmatprep.subr.mxu0 0.0
    %701 = vmatpush1.msra.mxu0 0.0
    %702 = vmatprep.subr.mxu0 0.0
    %703 = vmatpush1.msra.mxu0 0.0
    %704 = vmatprep.subr.mxu0 0.0
    %705 = vmatpush1.msra.mxu0 0.0
    %706 = vmatprep.subr.mxu0 0.0
    %707 = vmatpush1.msra.mxu0 0.0
    %708 = vmatprep.subr.mxu0 0.0
    %709 = vmatpush1.msra.mxu0 0.0
    %710 = vmatprep.subr.mxu0 0.0
    %711 = vmatpush1.msra.mxu0 0.0
    %712 = vmatprep.subr.mxu0 0.0
    %713 = vmatpush1.msra.mxu0 0.0
    %714 = vmatprep.subr.mxu0 0.0
    %715 = vmatpush1.msra.mxu0 0.0
    %716 = vmatprep.subr.mxu0 0.0
    %717 = vmatpush1.msra.mxu0 0.0
    %718 = vmatprep.subr.mxu0 0.0
    %719 = vmatpush1.msra.mxu0 0.0
    %720 = vmatprep.subr.mxu0 0.0
    %721 = vmatpush1.msra.mxu0 0.0
    %722 = vmatprep.subr.mxu0 0.0
    %723 = vmatpush1.msra.mxu0 0.0
    %724 = vmatprep.subr.mxu0 0.0
    %725 = vmatpush1.msra.mxu0 %v304
    %726 = vmatprep.subr.mxu0 0.0
    %727 = vmatpush2.msra.mxu0 0.0
    %728 = vmatprep.subr.mxu0 0.0
    %729 = vmatpush2.msra.mxu0 0.0
    %730 = vmatprep.subr.mxu0 0.0
    %731 = vmatpush2.msra.mxu0 0.0
    %732 = vmatprep.subr.mxu0 0.0
    %733 = vmatpush2.msra.mxu0 0.0
    %734 = vmatprep.subr.mxu0 0.0
    %735 = vmatpush2.msra.mxu0 0.0
    %736 = vmatprep.subr.mxu0 0.0
    %737 = vmatpush2.msra.mxu0 0.0
    %738 = vmatprep.subr.mxu0 0.0
    %739 = vmatpush2.msra.mxu0 0.0
    %740 = vmatprep.subr.mxu0 0.0
    %741 = vmatpush2.msra.mxu0 0.0
    %742 = vmatprep.subr.mxu0 0.0
    %743 = vmatpush2.msra.mxu0 0.0
    %744 = vmatprep.subr.mxu0 0.0
    %745 = vmatpush2.msra.mxu0 0.0
    %746 = vmatprep.subr.mxu0 0.0
    %747 = vmatpush2.msra.mxu0 0.0
    %748 = vmatprep.subr.mxu0 0.0
    %749 = vmatpush2.msra.mxu0 0.0
    %750 = vmatprep.subr.mxu0 0.0
    %751 = vmatpush2.msra.mxu0 0.0
    %752 = vmatprep.subr.mxu0 0.0
    %753 = vmatpush2.msra.mxu0 0.0
    %754 = vmatprep.subr.mxu0 0.0
    %755 = vmatpush2.msra.mxu0 0.0
    %756 = vmatprep.subr.mxu0 0.0
    %757 = vmatpush2.msra.mxu0 0.0
    %758 = vmatprep.mubr.f32.mxu0 0.0
    %759 = vmatmul.mubr.f32.gmra.mxu0 %v692
    %v760 = vpop.f32.mrf.mxu0
    %v761 = vadd.f32 0.0, %v760
    %v762 = vpop.f32.mrf.mxu0
    %763 = vdwg.mxu0
    %v764 = vsel %vm679, %v676, -inf
    %765 = vmax.xlane.f32.xlu0 %v764
    %v766 = vpop.xlane.xlu0 %765
    %v767 = vsub.f32 %v676, %v766
    %v768 = vmul.f32 %v767, 1.442695
    %v769 = vpow.pop %v768
    %v770 = vsel %vm679, %v769, 0.0
    %771 = vadd.xlane.f32.xlu0 %v770
    %v772 = vpop.xlane.xlu0 %771
    %v773 = vrcp.pop %v772
    %v774 = vmul.f32 %v769, %v773
    %v776 = vsel %vm679, %v774, 0
    %778 = vmatprep.subr.mxu0 0.0
    %779 = vmatpush1.msra.mxu0 0.0
    %780 = vmatprep.subr.mxu0 0.0
    %781 = vmatpush1.msra.mxu0 0.0
    %782 = vmatprep.subr.mxu0 0.0
    %783 = vmatpush1.msra.mxu0 0.0
    %784 = vmatprep.subr.mxu0 0.0
    %785 = vmatpush1.msra.mxu0 0.0
    %786 = vmatprep.subr.mxu0 0.0
    %787 = vmatpush1.msra.mxu0 0.0
    %788 = vmatprep.subr.mxu0 0.0
    %789 = vmatpush1.msra.mxu0 0.0
    %790 = vmatprep.subr.mxu0 0.0
    %791 = vmatpush1.msra.mxu0 0.0
    %792 = vmatprep.subr.mxu0 0.0
    %793 = vmatpush1.msra.mxu0 0.0
    %794 = vmatprep.subr.mxu0 0.0
    %795 = vmatpush1.msra.mxu0 0.0
    %796 = vmatprep.subr.mxu0 0.0
    %797 = vmatpush1.msra.mxu0 0.0
    %798 = vmatprep.subr.mxu0 0.0
    %799 = vmatpush1.msra.mxu0 0.0
    %800 = vmatprep.subr.mxu0 0.0
    %801 = vmatpush1.msra.mxu0 0.0
    %802 = vmatprep.subr.mxu0 0.0
    %803 = vmatpush1.msra.mxu0 0.0
    %804 = vmatprep.subr.mxu0 0.0
    %805 = vmatpush1.msra.mxu0 0.0
    %806 = vmatprep.subr.mxu0 0.0
    %807 = vmatpush1.msra.mxu0 0.0
    %808 = vmatprep.subr.mxu0 0.0
    %809 = vmatpush1.msra.mxu0 %v294
    %810 = vmatprep.subr.mxu0 0.0
    %811 = vmatpush2.msra.mxu0 0.0
    %812 = vmatprep.subr.mxu0 0.0
    %813 = vmatpush2.msra.mxu0 0.0
    %814 = vmatprep.subr.mxu0 0.0
    %815 = vmatpush2.msra.mxu0 0.0
    %816 = vmatprep.subr.mxu0 0.0
    %817 = vmatpush2.msra.mxu0 0.0
    %818 = vmatprep.subr.mxu0 0.0
    %819 = vmatpush2.msra.mxu0 0.0
    %820 = vmatprep.subr.mxu0 0.0
    %821 = vmatpush2.msra.mxu0 0.0
    %822 = vmatprep.subr.mxu0 0.0
    %823 = vmatpush2.msra.mxu0 0.0
    %824 = vmatprep.subr.mxu0 0.0
    %825 = vmatpush2.msra.mxu0 0.0
    %826 = vmatprep.subr.mxu0 0.0
    %827 = vmatpush2.msra.mxu0 0.0
    %828 = vmatprep.subr.mxu0 0.0
    %829 = vmatpush2.msra.mxu0 0.0
    %830 = vmatprep.subr.mxu0 0.0
    %831 = vmatpush2.msra.mxu0 0.0
    %832 = vmatprep.subr.mxu0 0.0
    %833 = vmatpush2.msra.mxu0 0.0
    %834 = vmatprep.subr.mxu0 0.0
    %835 = vmatpush2.msra.mxu0 0.0
    %836 = vmatprep.subr.mxu0 0.0
    %837 = vmatpush2.msra.mxu0 0.0
    %838 = vmatprep.subr.mxu0 0.0
    %839 = vmatpush2.msra.mxu0 0.0
    %840 = vmatprep.subr.mxu0 0.0
    %841 = vmatpush2.msra.mxu0 0.0
    %842 = vmatprep.mubr.f32.mxu0 0.0
    %843 = vmatmul.mubr.f32.gmra.mxu0 %v776
    %v844 = vpop.f32.mrf.mxu0
    %v845 = vadd.f32 0.0, %v844
    %v846 = vpop.f32.mrf.mxu0
    %847 = vdwg.mxu0
    %v849 = vsel %vm323, %v520, 0
    %v852 = vsel %vm323, %v530, 0
    %854 = vmatprep.subr.mxu0 0.0
    %855 = vmatpush1.xpose.msra.mxu0 0.0
    %856 = vmatprep.subr.mxu0 0.0
    %857 = vmatpush1.xpose.msra.mxu0 0.0
    %858 = vmatprep.subr.mxu0 0.0
    %859 = vmatpush1.xpose.msra.mxu0 0.0
    %860 = vmatprep.subr.mxu0 0.0
    %861 = vmatpush1.xpose.msra.mxu0 0.0
    %862 = vmatprep.subr.mxu0 0.0
    %863 = vmatpush1.xpose.msra.mxu0 0.0
    %864 = vmatprep.subr.mxu0 0.0
    %865 = vmatpush1.xpose.msra.mxu0 0.0
    %866 = vmatprep.subr.mxu0 0.0
    %867 = vmatpush1.xpose.msra.mxu0 0.0
    %868 = vmatprep.subr.mxu0 0.0
    %869 = vmatpush1.xpose.msra.mxu0 0.0
    %870 = vmatprep.subr.mxu0 0.0
    %871 = vmatpush1.xpose.msra.mxu0 0.0
    %872 = vmatprep.subr.mxu0 0.0
    %873 = vmatpush1.xpose.msra.mxu0 0.0
    %874 = vmatprep.subr.mxu0 0.0
    %875 = vmatpush1.xpose.msra.mxu0 0.0
    %876 = vmatprep.subr.mxu0 0.0
    %877 = vmatpush1.xpose.msra.mxu0 0.0
    %878 = vmatprep.subr.mxu0 0.0
    %879 = vmatpush1.xpose.msra.mxu0 0.0
    %880 = vmatprep.subr.mxu0 0.0
    %881 = vmatpush1.xpose.msra.mxu0 0.0
    %882 = vmatprep.subr.mxu0 0.0
    %883 = vmatpush1.xpose.msra.mxu0 0.0
    %884 = vmatprep.subr.mxu0 0.0
    %885 = vmatpush1.xpose.msra.mxu0 %v852
    %886 = vmatprep.subr.mxu0 0.0
    %887 = vmatpush2.xpose.msra.mxu0 0.0
    %888 = vmatprep.subr.mxu0 0.0
    %889 = vmatpush2.xpose.msra.mxu0 0.0
    %890 = vmatprep.subr.mxu0 0.0
    %891 = vmatpush2.xpose.msra.mxu0 0.0
    %892 = vmatprep.subr.mxu0 0.0
    %893 = vmatpush2.xpose.msra.mxu0 0.0
    %894 = vmatprep.subr.mxu0 0.0
    %895 = vmatpush2.xpose.msra.mxu0 0.0
    %896 = vmatprep.subr.mxu0 0.0
    %897 = vmatpush2.xpose.msra.mxu0 0.0
    %898 = vmatprep.subr.mxu0 0.0
    %899 = vmatpush2.xpose.msra.mxu0 0.0
    %900 = vmatprep.subr.mxu0 0.0
    %901 = vmatpush2.xpose.msra.mxu0 0.0
    %902 = vmatprep.subr.mxu0 0.0
    %903 = vmatpush2.xpose.msra.mxu0 0.0
    %904 = vmatprep.subr.mxu0 0.0
    %905 = vmatpush2.xpose.msra.mxu0 0.0
    %906 = vmatprep.subr.mxu0 0.0
    %907 = vmatpush2.xpose.msra.mxu0 0.0
    %908 = vmatprep.subr.mxu0 0.0
    %909 = vmatpush2.xpose.msra.mxu0 0.0
    %910 = vmatprep.subr.mxu0 0.0
    %911 = vmatpush2.xpose.msra.mxu0 0.0
    %912 = vmatprep.subr.mxu0 0.0
    %913 = vmatpush2.xpose.msra.mxu0 0.0
    %914 = vmatprep.subr.mxu0 0.0
    %915 = vmatpush2.xpose.msra.mxu0 0.0
    %916 = vmatprep.subr.mxu0 0.0
    %917 = vmatpush2.xpose.msra.mxu0 0.0
    %918 = vmatprep.mubr.f32.mxu0 0.0
    %919 = vmatmul.mubr.f32.gmra.mxu0 %v849
    %v920 = vpop.f32.mrf.mxu0
    %v921 = vadd.f32 0.0, %v920
    %v922 = vpop.f32.mrf.mxu0
    %923 = vdwg.mxu0
    %924 = vmatprep.subr.mxu0 0.0
    %925 = vmatpush1.xpose.msra.mxu0 0.0
    %926 = vmatprep.subr.mxu0 0.0
    %927 = vmatpush1.xpose.msra.mxu0 0.0
    %928 = vmatprep.subr.mxu0 0.0
    %929 = vmatpush1.xpose.msra.mxu0 0.0
    %930 = vmatprep.subr.mxu0 0.0
    %931 = vmatpush1.xpose.msra.mxu0 0.0
    %932 = vmatprep.subr.mxu0 0.0
    %933 = vmatpush1.xpose.msra.mxu0 0.0
    %934 = vmatprep.subr.mxu0 0.0
    %935 = vmatpush1.xpose.msra.mxu0 0.0
    %936 = vmatprep.subr.mxu0 0.0
    %937 = vmatpush1.xpose.msra.mxu0 0.0
    %938 = vmatprep.subr.mxu0 0.0
    %939 = vmatpush1.xpose.msra.mxu0 0.0
    %940 = vmatprep.subr.mxu0 0.0
    %941 = vmatpush1.xpose.msra.mxu0 0.0
    %942 = vmatprep.subr.mxu0 0.0
    %943 = vmatpush1.xpose.msra.mxu0 0.0
    %944 = vmatprep.subr.mxu0 0.0
    %945 = vmatpush1.xpose.msra.mxu0 0.0
    %946 = vmatprep.subr.mxu0 0.0
    %947 = vmatpush1.xpose.msra.mxu0 0.0
    %948 = vmatprep.subr.mxu0 0.0
    %949 = vmatpush1.xpose.msra.mxu0 0.0
    %950 = vmatprep.subr.mxu0 0.0
    %951 = vmatpush1.xpose.msra.mxu0 0.0
    %952 = vmatprep.subr.mxu0 0.0
    %953 = vmatpush1.xpose.msra.mxu0 0.0
    %954 = vmatprep.subr.mxu0 0.0
    %955 = vmatpush1.xpose.msra.mxu0 %v849
    %956 = vmatprep.subr.mxu0 0.0
    %957 = vmatpush2.xpose.msra.mxu0 0.0
    %958 = vmatprep.subr.mxu0 0.0
    %959 = vmatpush2.xpose.msra.mxu0 0.0
    %960 = vmatprep.subr.mxu0 0.0
    %961 = vmatpush2.xpose.msra.mxu0 0.0
    %962 = vmatprep.subr.mxu0 0.0
    %963 = vmatpush2.xpose.msra.mxu0 0.0
    %964 = vmatprep.subr.mxu0 0.0
    %965 = vmatpush2.xpose.msra.mxu0 0.0
    %966 = vmatprep.subr.mxu0 0.0
    %967 = vmatpush2.xpose.msra.mxu0 0.0
    %968 = vmatprep.subr.mxu0 0.0
    %969 = vmatpush2.xpose.msra.mxu0 0.0
    %970 = vmatprep.subr.mxu0 0.0
    %971 = vmatpush2.xpose.msra.mxu0 0.0
    %972 = vmatprep.subr.mxu0 0.0
    %973 = vmatpush2.xpose.msra.mxu0 0.0
    %974 = vmatprep.subr.mxu0 0.0
    %975 = vmatpush2.xpose.msra.mxu0 0.0
    %976 = vmatprep.subr.mxu0 0.0
    %977 = vmatpush2.xpose.msra.mxu0 0.0
    %978 = vmatprep.subr.mxu0 0.0
    %979 = vmatpush2.xpose.msra.mxu0 0.0
    %980 = vmatprep.subr.mxu0 0.0
    %981 = vmatpush2.xpose.msra.mxu0 0.0
    %982 = vmatprep.subr.mxu0 0.0
    %983 = vmatpush2.xpose.msra.mxu0 0.0
    %984 = vmatprep.subr.mxu0 0.0
    %985 = vmatpush2.xpose.msra.mxu0 0.0
    %986 = vmatprep.subr.mxu0 0.0
    %987 = vmatpush2.xpose.msra.mxu0 0.0
    %988 = vmatprep.mubr.f32.mxu0 0.0
    %989 = vmatmul.mubr.f32.gmra.mxu0 %v852
    %v990 = vpop.f32.mrf.mxu0
    %v991 = vadd.f32 0.0, %v990
    %v992 = vpop.f32.mrf.mxu0
    %993 = vdwg.mxu0
    %v994 = vsel %vm679, %v921, -inf
    %995 = vmax.xlane.f32.xlu0 %v994
    %v996 = vpop.xlane.xlu0 %995
    %v997 = vsub.f32 %v921, %v996
    %v998 = vmul.f32 %v997, 1.442695
    %v999 = vpow.pop %v998
    %v1000 = vsel %vm679, %v999, 0.0
    %1001 = vadd.xlane.f32.xlu0 %v1000
    %v1002 = vpop.xlane.xlu0 %1001
    %v1003 = vrcp.pop %v1002
    %v1004 = vmul.f32 %v999, %v1003
    %v1006 = vsel %vm679, %v1004, 0
    %1008 = vmatprep.subr.mxu0 0.0
    %1009 = vmatpush1.msra.mxu0 0.0
    %1010 = vmatprep.subr.mxu0 0.0
    %1011 = vmatpush1.msra.mxu0 0.0
    %1012 = vmatprep.subr.mxu0 0.0
    %1013 = vmatpush1.msra.mxu0 0.0
    %1014 = vmatprep.subr.mxu0 0.0
    %1015 = vmatpush1.msra.mxu0 0.0
    %1016 = vmatprep.subr.mxu0 0.0
    %1017 = vmatpush1.msra.mxu0 0.0
    %1018 = vmatprep.subr.mxu0 0.0
    %1019 = vmatpush1.msra.mxu0 0.0
    %1020 = vmatprep.subr.mxu0 0.0
    %1021 = vmatpush1.msra.mxu0 0.0
    %1022 = vmatprep.subr.mxu0 0.0
    %1023 = vmatpush1.msra.mxu0 0.0
    %1024 = vmatprep.subr.mxu0 0.0
    %1025 = vmatpush1.msra.mxu0 0.0
    %1026 = vmatprep.subr.mxu0 0.0
    %1027 = vmatpush1.msra.mxu0 0.0
    %1028 = vmatprep.subr.mxu0 0.0
    %1029 = vmatpush1.msra.mxu0 0.0
    %1030 = vmatprep.subr.mxu0 0.0
    %1031 = vmatpush1.msra.mxu0 0.0
    %1032 = vmatprep.subr.mxu0 0.0
    %1033 = vmatpush1.msra.mxu0 0.0
    %1034 = vmatprep.subr.mxu0 0.0
    %1035 = vmatpush1.msra.mxu0 0.0
    %1036 = vmatprep.subr.mxu0 0.0
    %1037 = vmatpush1.msra.mxu0 0.0
    %1038 = vmatprep.subr.mxu0 0.0
    %1039 = vmatpush1.msra.mxu0 %v309
    %1040 = vmatprep.subr.mxu0 0.0
    %1041 = vmatpush2.msra.mxu0 0.0
    %1042 = vmatprep.subr.mxu0 0.0
    %1043 = vmatpush2.msra.mxu0 0.0
    %1044 = vmatprep.subr.mxu0 0.0
    %1045 = vmatpush2.msra.mxu0 0.0
    %1046 = vmatprep.subr.mxu0 0.0
    %1047 = vmatpush2.msra.mxu0 0.0
    %1048 = vmatprep.subr.mxu0 0.0
    %1049 = vmatpush2.msra.mxu0 0.0
    %1050 = vmatprep.subr.mxu0 0.0
    %1051 = vmatpush2.msra.mxu0 0.0
    %1052 = vmatprep.subr.mxu0 0.0
    %1053 = vmatpush2.msra.mxu0 0.0
    %1054 = vmatprep.subr.mxu0 0.0
    %1055 = vmatpush2.msra.mxu0 0.0
    %1056 = vmatprep.subr.mxu0 0.0
    %1057 = vmatpush2.msra.mxu0 0.0
    %1058 = vmatprep.subr.mxu0 0.0
    %1059 = vmatpush2.msra.mxu0 0.0
    %1060 = vmatprep.subr.mxu0 0.0
    %1061 = vmatpush2.msra.mxu0 0.0
    %1062 = vmatprep.subr.mxu0 0.0
    %1063 = vmatpush2.msra.mxu0 0.0
    %1064 = vmatprep.subr.mxu0 0.0
    %1065 = vmatpush2.msra.mxu0 0.0
    %1066 = vmatprep.subr.mxu0 0.0
    %1067 = vmatpush2.msra.mxu0 0.0
    %1068 = vmatprep.subr.mxu0 0.0
    %1069 = vmatpush2.msra.mxu0 0.0
    %1070 = vmatprep.subr.mxu0 0.0
    %1071 = vmatpush2.msra.mxu0 0.0
    %1072 = vmatprep.mubr.f32.mxu0 0.0
    %1073 = vmatmul.mubr.f32.gmra.mxu0 %v1006
    %v1074 = vpop.f32.mrf.mxu0
    %v1075 = vadd.f32 0.0, %v1074
    %v1076 = vpop.f32.mrf.mxu0
    %1077 = vdwg.mxu0
    %v1078 = vsel %vm679, %v991, -inf
    %1079 = vmax.xlane.f32.xlu0 %v1078
    %v1080 = vpop.xlane.xlu0 %1079
    %v1081 = vsub.f32 %v991, %v1080
    %v1082 = vmul.f32 %v1081, 1.442695
    %v1083 = vpow.pop %v1082
    %v1084 = vsel %vm679, %v1083, 0.0
    %1085 = vadd.xlane.f32.xlu0 %v1084
    %v1086 = vpop.xlane.xlu0 %1085
    %v1087 = vrcp.pop %v1086
    %v1088 = vmul.f32 %v1083, %v1087
    %v1090 = vsel %vm679, %v1088, 0
    %1092 = vmatprep.subr.mxu0 0.0
    %1093 = vmatpush1.msra.mxu0 0.0
    %1094 = vmatprep.subr.mxu0 0.0
    %1095 = vmatpush1.msra.mxu0 0.0
    %1096 = vmatprep.subr.mxu0 0.0
    %1097 = vmatpush1.msra.mxu0 0.0
    %1098 = vmatprep.subr.mxu0 0.0
    %1099 = vmatpush1.msra.mxu0 0.0
    %1100 = vmatprep.subr.mxu0 0.0
    %1101 = vmatpush1.msra.mxu0 0.0
    %1102 = vmatprep.subr.mxu0 0.0
    %1103 = vmatpush1.msra.mxu0 0.0
    %1104 = vmatprep.subr.mxu0 0.0
    %1105 = vmatpush1.msra.mxu0 0.0
    %1106 = vmatprep.subr.mxu0 0.0
    %1107 = vmatpush1.msra.mxu0 0.0
    %1108 = vmatprep.subr.mxu0 0.0
    %1109 = vmatpush1.msra.mxu0 0.0
    %1110 = vmatprep.subr.mxu0 0.0
    %1111 = vmatpush1.msra.mxu0 0.0
    %1112 = vmatprep.subr.mxu0 0.0
    %1113 = vmatpush1.msra.mxu0 0.0
    %1114 = vmatprep.subr.mxu0 0.0
    %1115 = vmatpush1.msra.mxu0 0.0
    %1116 = vmatprep.subr.mxu0 0.0
    %1117 = vmatpush1.msra.mxu0 0.0
    %1118 = vmatprep.subr.mxu0 0.0
    %1119 = vmatpush1.msra.mxu0 0.0
    %1120 = vmatprep.subr.mxu0 0.0
    %1121 = vmatpush1.msra.mxu0 0.0
    %1122 = vmatprep.subr.mxu0 0.0
    %1123 = vmatpush1.msra.mxu0 %v299
    %1124 = vmatprep.subr.mxu0 0.0
    %1125 = vmatpush2.msra.mxu0 0.0
    %1126 = vmatprep.subr.mxu0 0.0
    %1127 = vmatpush2.msra.mxu0 0.0
    %1128 = vmatprep.subr.mxu0 0.0
    %1129 = vmatpush2.msra.mxu0 0.0
    %1130 = vmatprep.subr.mxu0 0.0
    %1131 = vmatpush2.msra.mxu0 0.0
    %1132 = vmatprep.subr.mxu0 0.0
    %1133 = vmatpush2.msra.mxu0 0.0
    %1134 = vmatprep.subr.mxu0 0.0
    %1135 = vmatpush2.msra.mxu0 0.0
    %1136 = vmatprep.subr.mxu0 0.0
    %1137 = vmatpush2.msra.mxu0 0.0
    %1138 = vmatprep.subr.mxu0 0.0
    %1139 = vmatpush2.msra.mxu0 0.0
    %1140 = vmatprep.subr.mxu0 0.0
    %1141 = vmatpush2.msra.mxu0 0.0
    %1142 = vmatprep.subr.mxu0 0.0
    %1143 = vmatpush2.msra.mxu0 0.0
    %1144 = vmatprep.subr.mxu0 0.0
    %1145 = vmatpush2.msra.mxu0 0.0
    %1146 = vmatprep.subr.mxu0 0.0
    %1147 = vmatpush2.msra.mxu0 0.0
    %1148 = vmatprep.subr.mxu0 0.0
    %1149 = vmatpush2.msra.mxu0 0.0
    %1150 = vmatprep.subr.mxu0 0.0
    %1151 = vmatpush2.msra.mxu0 0.0
    %1152 = vmatprep.subr.mxu0 0.0
    %1153 = vmatpush2.msra.mxu0 0.0
    %1154 = vmatprep.subr.mxu0 0.0
    %1155 = vmatpush2.msra.mxu0 0.0
    %1156 = vmatprep.mubr.f32.mxu0 0.0
    %1157 = vmatmul.mubr.f32.gmra.mxu0 %v1090
    %v1158 = vpop.f32.mrf.mxu0
    %v1159 = vadd.f32 0.0, %v1158
    %v1160 = vpop.f32.mrf.mxu0
    %1161 = vdwg.mxu0
    %v1162 = vld [vmem:[%s8] sm:$0xff]
    %v1163 = vld [vmem:[%s8 + $0x8] sm:$0xff]
    %v1164 = vld [vmem:[%s8 + $0x10] sm:$0xff]
    %v1165 = vld [vmem:[%s8 + $0x18] sm:$0xff]
    %v1166 = vld [vmem:[%s9] sm:$0xff]
    %v1167 = vld [vmem:[%s9 + $0x8] sm:$0xff]
    %v1168 = vld [vmem:[%s9 + $0x10] sm:$0xff]
    %v1169 = vld [vmem:[%s9 + $0x18] sm:$0xff]
    %v1171 = vsel %vm323, %v761, 0
    %v1174 = vsel %vm323, %v1075, 0
    %v1177 = vsel %vm323, %v845, 0
    %v1180 = vsel %vm323, %v1159, 0
    %1182 = vmatprep.subr.mxu0 0.0
    %1183 = vmatpush1.msra.mxu0 0.0
    %1184 = vmatprep.subr.mxu0 0.0
    %1185 = vmatpush1.msra.mxu0 0.0
    %1186 = vmatprep.subr.mxu0 0.0
    %1187 = vmatpush1.msra.mxu0 0.0
    %1188 = vmatprep.subr.mxu0 0.0
    %1189 = vmatpush1.msra.mxu0 0.0
    %1190 = vmatprep.subr.mxu0 0.0
    %1191 = vmatpush1.msra.mxu0 0.0
    %1192 = vmatprep.subr.mxu0 0.0
    %1193 = vmatpush1.msra.mxu0 0.0
    %1194 = vmatprep.subr.mxu0 0.0
    %1195 = vmatpush1.msra.mxu0 0.0
    %1196 = vmatprep.subr.mxu0 0.0
    %1197 = vmatpush1.msra.mxu0 0.0
    %1198 = vmatprep.subr.mxu0 0.0
    %1199 = vmatpush1.msra.mxu0 0.0
    %1200 = vmatprep.subr.mxu0 0.0
    %1201 = vmatpush1.msra.mxu0 0.0
    %1202 = vmatprep.subr.mxu0 0.0
    %1203 = vmatpush1.msra.mxu0 0.0
    %1204 = vmatprep.subr.mxu0 0.0
    %1205 = vmatpush1.msra.mxu0 0.0
    %1206 = vmatprep.subr.mxu0 0.0
    %1207 = vmatpush1.msra.mxu0 %v1169
    %1208 = vmatprep.subr.mxu0 0.0
    %1209 = vmatpush1.msra.mxu0 %v1168
    %1210 = vmatprep.subr.mxu0 0.0
    %1211 = vmatpush1.msra.mxu0 %v1167
    %1212 = vmatprep.subr.mxu0 0.0
    %1213 = vmatpush1.msra.mxu0 %v1166
    %1214 = vmatprep.subr.mxu0 0.0
    %1215 = vmatpush2.msra.mxu0 0.0
    %1216 = vmatprep.subr.mxu0 0.0
    %1217 = vmatpush2.msra.mxu0 0.0
    %1218 = vmatprep.subr.mxu0 0.0
    %1219 = vmatpush2.msra.mxu0 0.0
    %1220 = vmatprep.subr.mxu0 0.0
    %1221 = vmatpush2.msra.mxu0 0.0
    %1222 = vmatprep.subr.mxu0 0.0
    %1223 = vmatpush2.msra.mxu0 0.0
    %1224 = vmatprep.subr.mxu0 0.0
    %1225 = vmatpush2.msra.mxu0 0.0
    %1226 = vmatprep.subr.mxu0 0.0
    %1227 = vmatpush2.msra.mxu0 0.0
    %1228 = vmatprep.subr.mxu0 0.0
    %1229 = vmatpush2.msra.mxu0 0.0
    %1230 = vmatprep.subr.mxu0 0.0
    %1231 = vmatpush2.msra.mxu0 0.0
    %1232 = vmatprep.subr.mxu0 0.0
    %1233 = vmatpush2.msra.mxu0 0.0
    %1234 = vmatprep.subr.mxu0 0.0
    %1235 = vmatpush2.msra.mxu0 0.0
    %1236 = vmatprep.subr.mxu0 0.0
    %1237 = vmatpush2.msra.mxu0 0.0
    %1238 = vmatprep.subr.mxu0 0.0
    %1239 = vmatpush2.msra.mxu0 0.0
    %1240 = vmatprep.subr.mxu0 0.0
    %1241 = vmatpush2.msra.mxu0 0.0
    %1242 = vmatprep.subr.mxu0 0.0
    %1243 = vmatpush2.msra.mxu0 0.0
    %1244 = vmatprep.subr.mxu0 0.0
    %1245 = vmatpush2.msra.mxu0 0.0
    %1246 = vmatprep.mubr.f32.mxu0 0.0
    %1247 = vmatmul.mubr.f32.gmra.mxu0 %v1171
    %v1248 = vpop.f32.mrf.mxu0
    %v1249 = vadd.f32 0.0, %v1248
    %v1250 = vpop.f32.mrf.mxu0
    %1251 = vmatprep.mubr.f32.mxu0 0.0
    %1252 = vmatmul.mubr.f32.gmra.mxu0 %v1174
    %v1253 = vpop.f32.mrf.mxu0
    %v1254 = vadd.f32 0.0, %v1253
    %v1255 = vpop.f32.mrf.mxu0
    %1256 = vmatprep.mubr.f32.mxu0 0.0
    %1257 = vmatmul.mubr.f32.gmra.mxu0 %v1177
    %v1258 = vpop.f32.mrf.mxu0
    %v1259 = vadd.f32 0.0, %v1258
    %v1260 = vpop.f32.mrf.mxu0
    %1261 = vmatprep.mubr.f32.mxu0 0.0
    %1262 = vmatmul.mubr.f32.gmra.mxu0 %v1180
    %v1263 = vpop.f32.mrf.mxu0
    %v1264 = vadd.f32 0.0, %v1263
    %v1265 = vpop.f32.mrf.mxu0
    %1266 = vdwg.mxu0
    %1267 = vmatprep.subr.mxu0 0.0
    %1268 = vmatpush1.msra.mxu0 0.0
    %1269 = vmatprep.subr.mxu0 0.0
    %1270 = vmatpush1.msra.mxu0 0.0
    %1271 = vmatprep.subr.mxu0 0.0
    %1272 = vmatpush1.msra.mxu0 0.0
    %1273 = vmatprep.subr.mxu0 0.0
    %1274 = vmatpush1.msra.mxu0 0.0
    %1275 = vmatprep.subr.mxu0 0.0
    %1276 = vmatpush1.msra.mxu0 0.0
    %1277 = vmatprep.subr.mxu0 0.0
    %1278 = vmatpush1.msra.mxu0 0.0
    %1279 = vmatprep.subr.mxu0 0.0
    %1280 = vmatpush1.msra.mxu0 0.0
    %1281 = vmatprep.subr.mxu0 0.0
    %1282 = vmatpush1.msra.mxu0 0.0
    %1283 = vmatprep.subr.mxu0 0.0
    %1284 = vmatpush1.msra.mxu0 0.0
    %1285 = vmatprep.subr.mxu0 0.0
    %1286 = vmatpush1.msra.mxu0 0.0
    %1287 = vmatprep.subr.mxu0 0.0
    %1288 = vmatpush1.msra.mxu0 0.0
    %1289 = vmatprep.subr.mxu0 0.0
    %1290 = vmatpush1.msra.mxu0 0.0
    %1291 = vmatprep.subr.mxu0 0.0
    %1292 = vmatpush1.msra.mxu0 %v1165
    %1293 = vmatprep.subr.mxu0 0.0
    %1294 = vmatpush1.msra.mxu0 %v1164
    %1295 = vmatprep.subr.mxu0 0.0
    %1296 = vmatpush1.msra.mxu0 %v1163
    %1297 = vmatprep.subr.mxu0 0.0
    %1298 = vmatpush1.msra.mxu0 %v1162
    %1299 = vmatprep.subr.mxu0 0.0
    %1300 = vmatpush2.msra.mxu0 0.0
    %1301 = vmatprep.subr.mxu0 0.0
    %1302 = vmatpush2.msra.mxu0 0.0
    %1303 = vmatprep.subr.mxu0 0.0
    %1304 = vmatpush2.msra.mxu0 0.0
    %1305 = vmatprep.subr.mxu0 0.0
    %1306 = vmatpush2.msra.mxu0 0.0
    %1307 = vmatprep.subr.mxu0 0.0
    %1308 = vmatpush2.msra.mxu0 0.0
    %1309 = vmatprep.subr.mxu0 0.0
    %1310 = vmatpush2.msra.mxu0 0.0
    %1311 = vmatprep.subr.mxu0 0.0
    %1312 = vmatpush2.msra.mxu0 0.0
    %1313 = vmatprep.subr.mxu0 0.0
    %1314 = vmatpush2.msra.mxu0 0.0
    %1315 = vmatprep.subr.mxu0 0.0
    %1316 = vmatpush2.msra.mxu0 0.0
    %1317 = vmatprep.subr.mxu0 0.0
    %1318 = vmatpush2.msra.mxu0 0.0
    %1319 = vmatprep.subr.mxu0 0.0
    %1320 = vmatpush2.msra.mxu0 0.0
    %1321 = vmatprep.subr.mxu0 0.0
    %1322 = vmatpush2.msra.mxu0 0.0
    %1323 = vmatprep.subr.mxu0 0.0
    %1324 = vmatpush2.msra.mxu0 0.0
    %1325 = vmatprep.subr.mxu0 0.0
    %1326 = vmatpush2.msra.mxu0 0.0
    %1327 = vmatprep.subr.mxu0 0.0
    %1328 = vmatpush2.msra.mxu0 0.0
    %1329 = vmatprep.subr.mxu0 0.0
    %1330 = vmatpush2.msra.mxu0 0.0
    %1331 = vmatprep.mubr.f32.mxu0 0.0
    %1332 = vmatmul.mubr.f32.gmra.mxu0 %v325
    %v1333 = vpop.f32.mrf.mxu0
    %v1334 = vadd.f32 %v1249, %v1333
    %v1335 = vpop.f32.mrf.mxu0
    %1336 = vmatprep.mubr.f32.mxu0 0.0
    %1337 = vmatmul.mubr.f32.gmra.mxu0 %v328
    %v1338 = vpop.f32.mrf.mxu0
    %v1339 = vadd.f32 %v1254, %v1338
    %v1340 = vpop.f32.mrf.mxu0
    %1341 = vmatprep.mubr.f32.mxu0 0.0
    %1342 = vmatmul.mubr.f32.gmra.mxu0 %v331
    %v1343 = vpop.f32.mrf.mxu0
    %v1344 = vadd.f32 %v1259, %v1343
    %v1345 = vpop.f32.mrf.mxu0
    %1346 = vmatprep.mubr.f32.mxu0 0.0
    %1347 = vmatmul.mubr.f32.gmra.mxu0 %v334
    %v1348 = vpop.f32.mrf.mxu0
    %v1349 = vadd.f32 %v1264, %v1348
    %v1350 = vpop.f32.mrf.mxu0
    %1351 = vdwg.mxu0
    %v1352 = vld [vmem:[%s10] sm:$0x1]
    %v1354 = vlaneseq
    %v1355 = vshrl.u32 %v1354, 7
    %v1356 = vsub.s32 0, %v1355
    %v1357 = vrot.slane %v1352, %v1356
    %v1359 = vadd.f32 %v1334, %v1357
    %v1360 = vadd.f32 %v1339, %v1357
    %v1361 = vadd.f32 %v1344, %v1357
    %v1362 = vadd.f32 %v1349, %v1357
    %v1363 = vmax.f32 %v1359, 0.0
    %v1364 = vmax.f32 %v1360, 0.0
    %v1365 = vmax.f32 %v1361, 0.0
    %v1366 = vmax.f32 %v1362, 0.0
    %v1367 = vld [vmem:[%s11] sm:$0xff]
    %v1368 = vld [vmem:[%s11 + $0x8] sm:$0xff]
    %v1369 = vld [vmem:[%s11 + $0x10] sm:$0xff]
    %v1370 = vld [vmem:[%s11 + $0x18] sm:$0xff]
    %v1371 = vld [vmem:[%s11 + $0x20] sm:$0xff]
    %v1372 = vld [vmem:[%s11 + $0x28] sm:$0xff]
    %v1373 = vld [vmem:[%s11 + $0x30] sm:$0xff]
    %v1374 = vld [vmem:[%s11 + $0x38] sm:$0xff]
    %v1375 = vld [vmem:[%s12] sm:$0x1]
    %v1377 = vlaneseq
    %v1378 = vshrl.u32 %v1377, 7
    %v1379 = vsub.s32 0, %v1378
    %v1380 = vrot.slane %v1375, %v1379
    %vm1382 = vcmask 523264
    %v1384 = vsel %vm1382, %v1363, 0
    %v1387 = vsel %vm1382, %v1364, 0
    %v1390 = vsel %vm1382, %v1365, 0
    %v1393 = vsel %vm1382, %v1366, 0
    %1395 = vmatprep.subr.mxu0 0.0
    %1396 = vmatpush1.msra.mxu0 0.0
    %1397 = vmatprep.subr.mxu0 0.0
    %1398 = vmatpush1.msra.mxu0 0.0
    %1399 = vmatprep.subr.mxu0 0.0
    %1400 = vmatpush1.msra.mxu0 0.0
    %1401 = vmatprep.subr.mxu0 0.0
    %1402 = vmatpush1.msra.mxu0 0.0
    %1403 = vmatprep.subr.mxu0 0.0
    %1404 = vmatpush1.msra.mxu0 0.0
    %1405 = vmatprep.subr.mxu0 0.0
    %1406 = vmatpush1.msra.mxu0 0.0
    %1407 = vmatprep.subr.mxu0 0.0
    %1408 = vmatpush1.msra.mxu0 0.0
    %1409 = vmatprep.subr.mxu0 0.0
    %1410 = vmatpush1.msra.mxu0 0.0
    %1411 = vmatprep.subr.mxu0 0.0
    %1412 = vmatpush1.msra.mxu0 %v1374
    %1413 = vmatprep.subr.mxu0 0.0
    %1414 = vmatpush1.msra.mxu0 %v1373
    %1415 = vmatprep.subr.mxu0 0.0
    %1416 = vmatpush1.msra.mxu0 %v1372
    %1417 = vmatprep.subr.mxu0 0.0
    %1418 = vmatpush1.msra.mxu0 %v1371
    %1419 = vmatprep.subr.mxu0 0.0
    %1420 = vmatpush1.msra.mxu0 %v1370
    %1421 = vmatprep.subr.mxu0 0.0
    %1422 = vmatpush1.msra.mxu0 %v1369
    %1423 = vmatprep.subr.mxu0 0.0
    %1424 = vmatpush1.msra.mxu0 %v1368
    %1425 = vmatprep.subr.mxu0 0.0
    %1426 = vmatpush1.msra.mxu0 %v1367
    %1427 = vmatprep.subr.mxu0 0.0
    %1428 = vmatpush2.msra.mxu0 0.0
    %1429 = vmatprep.subr.mxu0 0.0
    %1430 = vmatpush2.msra.mxu0 0.0
    %1431 = vmatprep.subr.mxu0 0.0
    %1432 = vmatpush2.msra.mxu0 0.0
    %1433 = vmatprep.subr.mxu0 0.0
    %1434 = vmatpush2.msra.mxu0 0.0
    %1435 = vmatprep.subr.mxu0 0.0
    %1436 = vmatpush2.msra.mxu0 0.0
    %1437 = vmatprep.subr.mxu0 0.0
    %1438 = vmatpush2.msra.mxu0 0.0
    %1439 = vmatprep.subr.mxu0 0.0
    %1440 = vmatpush2.msra.mxu0 0.0
    %1441 = vmatprep.subr.mxu0 0.0
    %1442 = vmatpush2.msra.mxu0 0.0
    %1443 = vmatprep.subr.mxu0 0.0
    %1444 = vmatpush2.msra.mxu0 0.0
    %1445 = vmatprep.subr.mxu0 0.0
    %1446 = vmatpush2.msra.mxu0 0.0
    %1447 = vmatprep.subr.mxu0 0.0
    %1448 = vmatpush2.msra.mxu0 0.0
    %1449 = vmatprep.subr.mxu0 0.0
    %1450 = vmatpush2.msra.mxu0 0.0
    %1451 = vmatprep.subr.mxu0 0.0
    %1452 = vmatpush2.msra.mxu0 0.0
    %1453 = vmatprep.subr.mxu0 0.0
    %1454 = vmatpush2.msra.mxu0 0.0
    %1455 = vmatprep.subr.mxu0 0.0
    %1456 = vmatpush2.msra.mxu0 0.0
    %1457 = vmatprep.subr.mxu0 0.0
    %1458 = vmatpush2.msra.mxu0 0.0
    %1459 = vmatprep.mubr.f32.mxu0 0.0
    %1460 = vmatmul.mubr.f32.gmra.mxu0 %v1384
    %v1461 = vpop.f32.mrf.mxu0
    %v1462 = vadd.f32 %v1380, %v1461
    %v1463 = vpop.f32.mrf.mxu0
    %1464 = vmatprep.mubr.f32.mxu0 0.0
    %1465 = vmatmul.mubr.f32.gmra.mxu0 %v1387
    %v1466 = vpop.f32.mrf.mxu0
    %v1467 = vadd.f32 %v1380, %v1466
    %v1468 = vpop.f32.mrf.mxu0
    %1469 = vmatprep.mubr.f32.mxu0 0.0
    %1470 = vmatmul.mubr.f32.gmra.mxu0 %v1390
    %v1471 = vpop.f32.mrf.mxu0
    %v1472 = vadd.f32 %v1380, %v1471
    %v1473 = vpop.f32.mrf.mxu0
    %1474 = vmatprep.mubr.f32.mxu0 0.0
    %1475 = vmatmul.mubr.f32.gmra.mxu0 %v1393
    %v1476 = vpop.f32.mrf.mxu0
    %v1477 = vadd.f32 %v1380, %v1476
    %v1478 = vpop.f32.mrf.mxu0
    %1479 = vdwg.mxu0
    %v1480 = vlaneseq
    %v1481 = vshrl.u32 %v1480, 7
    %v1482 = vmul.u32 %v1481, 8
    %vm1483 = vcmp.ge.s32.totalorder %v71, %v1482
    %v1484 = vadd.s32 %v1481, 1
    %v1485 = vmul.u32 %v1484, 8
    %vm1486 = vcmp.lt.s32.totalorder %v71, %v1485
    %vm1487 = vmand %vm1483, %vm1486
    %v1488 = vsel %vm1487, 1, 0
    %v1489 = vcvt.s32.f32 %v1488
    %v1490 = vadd.s32 %v1482, 16
    %vm1491 = vcmp.ge.s32.totalorder %v71, %v1490
    %v1492 = vadd.s32 %v1485, 16
    %vm1493 = vcmp.lt.s32.totalorder %v71, %v1492
    %vm1494 = vmand %vm1491, %vm1493
    %v1495 = vsel %vm1494, 1, 0
    %v1496 = vcvt.s32.f32 %v1495
    %v1498 = vsel %vm323, %v1489, 0
    %1500 = vmatprep.subr.mxu0 0.0
    %1501 = vmatpush1.msra.mxu0 0.0
    %1502 = vmatprep.subr.mxu0 0.0
    %1503 = vmatpush1.msra.mxu0 0.0
    %1504 = vmatprep.subr.mxu0 0.0
    %1505 = vmatpush1.msra.mxu0 0.0
    %1506 = vmatprep.subr.mxu0 0.0
    %1507 = vmatpush1.msra.mxu0 0.0
    %1508 = vmatprep.subr.mxu0 0.0
    %1509 = vmatpush1.msra.mxu0 0.0
    %1510 = vmatprep.subr.mxu0 0.0
    %1511 = vmatpush1.msra.mxu0 0.0
    %1512 = vmatprep.subr.mxu0 0.0
    %1513 = vmatpush1.msra.mxu0 0.0
    %1514 = vmatprep.subr.mxu0 0.0
    %1515 = vmatpush1.msra.mxu0 0.0
    %1516 = vmatprep.subr.mxu0 0.0
    %1517 = vmatpush1.msra.mxu0 0.0
    %1518 = vmatprep.subr.mxu0 0.0
    %1519 = vmatpush1.msra.mxu0 0.0
    %1520 = vmatprep.subr.mxu0 0.0
    %1521 = vmatpush1.msra.mxu0 0.0
    %1522 = vmatprep.subr.mxu0 0.0
    %1523 = vmatpush1.msra.mxu0 0.0
    %1524 = vmatprep.subr.mxu0 0.0
    %1525 = vmatpush1.msra.mxu0 %v1477
    %1526 = vmatprep.subr.mxu0 0.0
    %1527 = vmatpush1.msra.mxu0 %v1472
    %1528 = vmatprep.subr.mxu0 0.0
    %1529 = vmatpush1.msra.mxu0 %v1467
    %1530 = vmatprep.subr.mxu0 0.0
    %1531 = vmatpush1.msra.mxu0 %v1462
    %1532 = vmatprep.subr.mxu0 0.0
    %1533 = vmatpush2.msra.mxu0 0.0
    %1534 = vmatprep.subr.mxu0 0.0
    %1535 = vmatpush2.msra.mxu0 0.0
    %1536 = vmatprep.subr.mxu0 0.0
    %1537 = vmatpush2.msra.mxu0 0.0
    %1538 = vmatprep.subr.mxu0 0.0
    %1539 = vmatpush2.msra.mxu0 0.0
    %1540 = vmatprep.subr.mxu0 0.0
    %1541 = vmatpush2.msra.mxu0 0.0
    %1542 = vmatprep.subr.mxu0 0.0
    %1543 = vmatpush2.msra.mxu0 0.0
    %1544 = vmatprep.subr.mxu0 0.0
    %1545 = vmatpush2.msra.mxu0 0.0
    %1546 = vmatprep.subr.mxu0 0.0
    %1547 = vmatpush2.msra.mxu0 0.0
    %1548 = vmatprep.subr.mxu0 0.0
    %1549 = vmatpush2.msra.mxu0 0.0
    %1550 = vmatprep.subr.mxu0 0.0
    %1551 = vmatpush2.msra.mxu0 0.0
    %1552 = vmatprep.subr.mxu0 0.0
    %1553 = vmatpush2.msra.mxu0 0.0
    %1554 = vmatprep.subr.mxu0 0.0
    %1555 = vmatpush2.msra.mxu0 0.0
    %1556 = vmatprep.subr.mxu0 0.0
    %1557 = vmatpush2.msra.mxu0 0.0
    %1558 = vmatprep.subr.mxu0 0.0
    %1559 = vmatpush2.msra.mxu0 0.0
    %1560 = vmatprep.subr.mxu0 0.0
    %1561 = vmatpush2.msra.mxu0 0.0
    %1562 = vmatprep.subr.mxu0 0.0
    %1563 = vmatpush2.msra.mxu0 0.0
    %1564 = vmatprep.mubr.f32.mxu0 0.0
    %1565 = vmatmul.mubr.f32.gmra.mxu0 %v1498
    %v1566 = vpop.f32.mrf.mxu0
    %v1567 = vadd.f32 0.0, %v1566
    %v1568 = vpop.f32.mrf.mxu0
    %1569 = vdwg.mxu0
    %v1571 = vsel %vm323, %v1496, 0
    %1573 = vmatprep.subr.mxu0 0.0
    %1574 = vmatpush1.msra.mxu0 0.0
    %1575 = vmatprep.subr.mxu0 0.0
    %1576 = vmatpush1.msra.mxu0 0.0
    %1577 = vmatprep.subr.mxu0 0.0
    %1578 = vmatpush1.msra.mxu0 0.0
    %1579 = vmatprep.subr.mxu0 0.0
    %1580 = vmatpush1.msra.mxu0 0.0
    %1581 = vmatprep.subr.mxu0 0.0
    %1582 = vmatpush1.msra.mxu0 0.0
    %1583 = vmatprep.subr.mxu0 0.0
    %1584 = vmatpush1.msra.mxu0 0.0
    %1585 = vmatprep.subr.mxu0 0.0
    %1586 = vmatpush1.msra.mxu0 0.0
    %1587 = vmatprep.subr.mxu0 0.0
    %1588 = vmatpush1.msra.mxu0 0.0
    %1589 = vmatprep.subr.mxu0 0.0
    %1590 = vmatpush1.msra.mxu0 0.0
    %1591 = vmatprep.subr.mxu0 0.0
    %1592 = vmatpush1.msra.mxu0 0.0
    %1593 = vmatprep.subr.mxu0 0.0
    %1594 = vmatpush1.msra.mxu0 0.0
    %1595 = vmatprep.subr.mxu0 0.0
    %1596 = vmatpush1.msra.mxu0 0.0
    %1597 = vmatprep.subr.mxu0 0.0
    %1598 = vmatpush1.msra.mxu0 %v1477
    %1599 = vmatprep.subr.mxu0 0.0
    %1600 = vmatpush1.msra.mxu0 %v1472
    %1601 = vmatprep.subr.mxu0 0.0
    %1602 = vmatpush1.msra.mxu0 %v1467
    %1603 = vmatprep.subr.mxu0 0.0
    %1604 = vmatpush1.msra.mxu0 %v1462
    %1605 = vmatprep.subr.mxu0 0.0
    %1606 = vmatpush2.msra.mxu0 0.0
    %1607 = vmatprep.subr.mxu0 0.0
    %1608 = vmatpush2.msra.mxu0 0.0
    %1609 = vmatprep.subr.mxu0 0.0
    %1610 = vmatpush2.msra.mxu0 0.0
    %1611 = vmatprep.subr.mxu0 0.0
    %1612 = vmatpush2.msra.mxu0 0.0
    %1613 = vmatprep.subr.mxu0 0.0
    %1614 = vmatpush2.msra.mxu0 0.0
    %1615 = vmatprep.subr.mxu0 0.0
    %1616 = vmatpush2.msra.mxu0 0.0
    %1617 = vmatprep.subr.mxu0 0.0
    %1618 = vmatpush2.msra.mxu0 0.0
    %1619 = vmatprep.subr.mxu0 0.0
    %1620 = vmatpush2.msra.mxu0 0.0
    %1621 = vmatprep.subr.mxu0 0.0
    %1622 = vmatpush2.msra.mxu0 0.0
    %1623 = vmatprep.subr.mxu0 0.0
    %1624 = vmatpush2.msra.mxu0 0.0
    %1625 = vmatprep.subr.mxu0 0.0
    %1626 = vmatpush2.msra.mxu0 0.0
    %1627 = vmatprep.subr.mxu0 0.0
    %1628 = vmatpush2.msra.mxu0 0.0
    %1629 = vmatprep.subr.mxu0 0.0
    %1630 = vmatpush2.msra.mxu0 0.0
    %1631 = vmatprep.subr.mxu0 0.0
    %1632 = vmatpush2.msra.mxu0 0.0
    %1633 = vmatprep.subr.mxu0 0.0
    %1634 = vmatpush2.msra.mxu0 0.0
    %1635 = vmatprep.subr.mxu0 0.0
    %1636 = vmatpush2.msra.mxu0 0.0
    %1637 = vmatprep.mubr.f32.mxu0 0.0
    %1638 = vmatmul.mubr.f32.gmra.mxu0 %v1571
    %v1639 = vpop.f32.mrf.mxu0
    %v1640 = vadd.f32 0.0, %v1639
    %v1641 = vpop.f32.mrf.mxu0
    %1642 = vdwg.mxu0
    %v1643 = vld [vmem:[%s13] sm:$0xff]
    %v1644 = vld [vmem:[%s13 + $0x8] sm:$0xff]
    %v1645 = vld [vmem:[%s13 + $0x10] sm:$0xff]
    %v1646 = vld [vmem:[%s13 + $0x18] sm:$0xff]
    %v1647 = vld [vmem:[%s14] sm:$0xff]
    %v1648 = vld [vmem:[%s14 + $0x8] sm:$0xff]
    %v1649 = vld [vmem:[%s14 + $0x10] sm:$0xff]
    %v1650 = vld [vmem:[%s14 + $0x18] sm:$0xff]
    %v1652 = vsel %vm323, %v1640, 0
    %1654 = vmatprep.subr.mxu0 0.0
    %1655 = vmatpush1.msra.mxu0 0.0
    %1656 = vmatprep.subr.mxu0 0.0
    %1657 = vmatpush1.msra.mxu0 0.0
    %1658 = vmatprep.subr.mxu0 0.0
    %1659 = vmatpush1.msra.mxu0 0.0
    %1660 = vmatprep.subr.mxu0 0.0
    %1661 = vmatpush1.msra.mxu0 0.0
    %1662 = vmatprep.subr.mxu0 0.0
    %1663 = vmatpush1.msra.mxu0 0.0
    %1664 = vmatprep.subr.mxu0 0.0
    %1665 = vmatpush1.msra.mxu0 0.0
    %1666 = vmatprep.subr.mxu0 0.0
    %1667 = vmatpush1.msra.mxu0 0.0
    %1668 = vmatprep.subr.mxu0 0.0
    %1669 = vmatpush1.msra.mxu0 0.0
    %1670 = vmatprep.subr.mxu0 0.0
    %1671 = vmatpush1.msra.mxu0 0.0
    %1672 = vmatprep.subr.mxu0 0.0
    %1673 = vmatpush1.msra.mxu0 0.0
    %1674 = vmatprep.subr.mxu0 0.0
    %1675 = vmatpush1.msra.mxu0 0.0
    %1676 = vmatprep.subr.mxu0 0.0
    %1677 = vmatpush1.msra.mxu0 0.0
    %1678 = vmatprep.subr.mxu0 0.0
    %1679 = vmatpush1.msra.mxu0 %v1650
    %1680 = vmatprep.subr.mxu0 0.0
    %1681 = vmatpush1.msra.mxu0 %v1649
    %1682 = vmatprep.subr.mxu0 0.0
    %1683 = vmatpush1.msra.mxu0 %v1648
    %1684 = vmatprep.subr.mxu0 0.0
    %1685 = vmatpush1.msra.mxu0 %v1647
    %1686 = vmatprep.subr.mxu0 0.0
    %1687 = vmatpush2.msra.mxu0 0.0
    %1688 = vmatprep.subr.mxu0 0.0
    %1689 = vmatpush2.msra.mxu0 0.0
    %1690 = vmatprep.subr.mxu0 0.0
    %1691 = vmatpush2.msra.mxu0 0.0
    %1692 = vmatprep.subr.mxu0 0.0
    %1693 = vmatpush2.msra.mxu0 0.0
    %1694 = vmatprep.subr.mxu0 0.0
    %1695 = vmatpush2.msra.mxu0 0.0
    %1696 = vmatprep.subr.mxu0 0.0
    %1697 = vmatpush2.msra.mxu0 0.0
    %1698 = vmatprep.subr.mxu0 0.0
    %1699 = vmatpush2.msra.mxu0 0.0
    %1700 = vmatprep.subr.mxu0 0.0
    %1701 = vmatpush2.msra.mxu0 0.0
    %1702 = vmatprep.subr.mxu0 0.0
    %1703 = vmatpush2.msra.mxu0 0.0
    %1704 = vmatprep.subr.mxu0 0.0
    %1705 = vmatpush2.msra.mxu0 0.0
    %1706 = vmatprep.subr.mxu0 0.0
    %1707 = vmatpush2.msra.mxu0 0.0
    %1708 = vmatprep.subr.mxu0 0.0
    %1709 = vmatpush2.msra.mxu0 0.0
    %1710 = vmatprep.subr.mxu0 0.0
    %1711 = vmatpush2.msra.mxu0 0.0
    %1712 = vmatprep.subr.mxu0 0.0
    %1713 = vmatpush2.msra.mxu0 0.0
    %1714 = vmatprep.subr.mxu0 0.0
    %1715 = vmatpush2.msra.mxu0 0.0
    %1716 = vmatprep.subr.mxu0 0.0
    %1717 = vmatpush2.msra.mxu0 0.0
    %1718 = vmatprep.mubr.f32.mxu0 0.0
    %1719 = vmatmul.mubr.f32.gmra.mxu0 %v1652
    %v1720 = vpop.f32.mrf.mxu0
    %v1721 = vadd.f32 0.0, %v1720
    %v1722 = vpop.f32.mrf.mxu0
    %1723 = vdwg.mxu0
    %v1725 = vsel %vm323, %v1567, 0
    %1727 = vmatprep.subr.mxu0 0.0
    %1728 = vmatpush1.msra.mxu0 0.0
    %1729 = vmatprep.subr.mxu0 0.0
    %1730 = vmatpush1.msra.mxu0 0.0
    %1731 = vmatprep.subr.mxu0 0.0
    %1732 = vmatpush1.msra.mxu0 0.0
    %1733 = vmatprep.subr.mxu0 0.0
    %1734 = vmatpush1.msra.mxu0 0.0
    %1735 = vmatprep.subr.mxu0 0.0
    %1736 = vmatpush1.msra.mxu0 0.0
    %1737 = vmatprep.subr.mxu0 0.0
    %1738 = vmatpush1.msra.mxu0 0.0
    %1739 = vmatprep.subr.mxu0 0.0
    %1740 = vmatpush1.msra.mxu0 0.0
    %1741 = vmatprep.subr.mxu0 0.0
    %1742 = vmatpush1.msra.mxu0 0.0
    %1743 = vmatprep.subr.mxu0 0.0
    %1744 = vmatpush1.msra.mxu0 0.0
    %1745 = vmatprep.subr.mxu0 0.0
    %1746 = vmatpush1.msra.mxu0 0.0
    %1747 = vmatprep.subr.mxu0 0.0
    %1748 = vmatpush1.msra.mxu0 0.0
    %1749 = vmatprep.subr.mxu0 0.0
    %1750 = vmatpush1.msra.mxu0 0.0
    %1751 = vmatprep.subr.mxu0 0.0
    %1752 = vmatpush1.msra.mxu0 %v1646
    %1753 = vmatprep.subr.mxu0 0.0
    %1754 = vmatpush1.msra.mxu0 %v1645
    %1755 = vmatprep.subr.mxu0 0.0
    %1756 = vmatpush1.msra.mxu0 %v1644
    %1757 = vmatprep.subr.mxu0 0.0
    %1758 = vmatpush1.msra.mxu0 %v1643
    %1759 = vmatprep.subr.mxu0 0.0
    %1760 = vmatpush2.msra.mxu0 0.0
    %1761 = vmatprep.subr.mxu0 0.0
    %1762 = vmatpush2.msra.mxu0 0.0
    %1763 = vmatprep.subr.mxu0 0.0
    %1764 = vmatpush2.msra.mxu0 0.0
    %1765 = vmatprep.subr.mxu0 0.0
    %1766 = vmatpush2.msra.mxu0 0.0
    %1767 = vmatprep.subr.mxu0 0.0
    %1768 = vmatpush2.msra.mxu0 0.0
    %1769 = vmatprep.subr.mxu0 0.0
    %1770 = vmatpush2.msra.mxu0 0.0
    %1771 = vmatprep.subr.mxu0 0.0
    %1772 = vmatpush2.msra.mxu0 0.0
    %1773 = vmatprep.subr.mxu0 0.0
    %1774 = vmatpush2.msra.mxu0 0.0
    %1775 = vmatprep.subr.mxu0 0.0
    %1776 = vmatpush2.msra.mxu0 0.0
    %1777 = vmatprep.subr.mxu0 0.0
    %1778 = vmatpush2.msra.mxu0 0.0
    %1779 = vmatprep.subr.mxu0 0.0
    %1780 = vmatpush2.msra.mxu0 0.0
    %1781 = vmatprep.subr.mxu0 0.0
    %1782 = vmatpush2.msra.mxu0 0.0
    %1783 = vmatprep.subr.mxu0 0.0
    %1784 = vmatpush2.msra.mxu0 0.0
    %1785 = vmatprep.subr.mxu0 0.0
    %1786 = vmatpush2.msra.mxu0 0.0
    %1787 = vmatprep.subr.mxu0 0.0
    %1788 = vmatpush2.msra.mxu0 0.0
    %1789 = vmatprep.subr.mxu0 0.0
    %1790 = vmatpush2.msra.mxu0 0.0
    %1791 = vmatprep.mubr.f32.mxu0 0.0
    %1792 = vmatmul.mubr.f32.gmra.mxu0 %v1725
    %v1793 = vpop.f32.mrf.mxu0
    %v1794 = vadd.f32 %v1721, %v1793
    %v1795 = vpop.f32.mrf.mxu0
    %1796 = vdwg.mxu0
    %v1797 = vld [vmem:[%s15] sm:$0x1]
    %v1799 = vlaneseq
    %v1800 = vshrl.u32 %v1799, 7
    %v1801 = vsub.s32 0, %v1800
    %v1802 = vrot.slane %v1797, %v1801
    %v1804 = vadd.f32 %v1794, %v1802
    %v1805 = vmax.f32 %v1804, 0.0
    %v1806 = vld [vmem:[%s16] sm:$0xff]
    %v1807 = vld [vmem:[%s16 + $0x8] sm:$0xff]
    %v1808 = vld [vmem:[%s16 + $0x10] sm:$0xff]
    %v1809 = vld [vmem:[%s16 + $0x18] sm:$0xff]
    %v1810 = vld [vmem:[%s16 + $0x20] sm:$0xff]
    %v1811 = vld [vmem:[%s16 + $0x28] sm:$0xff]
    %v1812 = vld [vmem:[%s16 + $0x30] sm:$0xff]
    %v1813 = vld [vmem:[%s16 + $0x38] sm:$0xff]
    %v1814 = vld [vmem:[%s17] sm:$0x1]
    %v1816 = vlaneseq
    %v1817 = vshrl.u32 %v1816, 7
    %v1818 = vsub.s32 0, %v1817
    %v1819 = vrot.slane %v1814, %v1818
    %v1822 = vsel %vm1382, %v1805, 0
    %1824 = vmatprep.subr.mxu0 0.0
    %1825 = vmatpush1.msra.mxu0 0.0
    %1826 = vmatprep.subr.mxu0 0.0
    %1827 = vmatpush1.msra.mxu0 0.0
    %1828 = vmatprep.subr.mxu0 0.0
    %1829 = vmatpush1.msra.mxu0 0.0
    %1830 = vmatprep.subr.mxu0 0.0
    %1831 = vmatpush1.msra.mxu0 0.0
    %1832 = vmatprep.subr.mxu0 0.0
    %1833 = vmatpush1.msra.mxu0 0.0
    %1834 = vmatprep.subr.mxu0 0.0
    %1835 = vmatpush1.msra.mxu0 0.0
    %1836 = vmatprep.subr.mxu0 0.0
    %1837 = vmatpush1.msra.mxu0 0.0
    %1838 = vmatprep.subr.mxu0 0.0
    %1839 = vmatpush1.msra.mxu0 0.0
    %1840 = vmatprep.subr.mxu0 0.0
    %1841 = vmatpush1.msra.mxu0 %v1813
    %1842 = vmatprep.subr.mxu0 0.0
    %1843 = vmatpush1.msra.mxu0 %v1812
    %1844 = vmatprep.subr.mxu0 0.0
    %1845 = vmatpush1.msra.mxu0 %v1811
    %1846 = vmatprep.subr.mxu0 0.0
    %1847 = vmatpush1.msra.mxu0 %v1810
    %1848 = vmatprep.subr.mxu0 0.0
    %1849 = vmatpush1.msra.mxu0 %v1809
    %1850 = vmatprep.subr.mxu0 0.0
    %1851 = vmatpush1.msra.mxu0 %v1808
    %1852 = vmatprep.subr.mxu0 0.0
    %1853 = vmatpush1.msra.mxu0 %v1807
    %1854 = vmatprep.subr.mxu0 0.0
    %1855 = vmatpush1.msra.mxu0 %v1806
    %1856 = vmatprep.subr.mxu0 0.0
    %1857 = vmatpush2.msra.mxu0 0.0
    %1858 = vmatprep.subr.mxu0 0.0
    %1859 = vmatpush2.msra.mxu0 0.0
    %1860 = vmatprep.subr.mxu0 0.0
    %1861 = vmatpush2.msra.mxu0 0.0
    %1862 = vmatprep.subr.mxu0 0.0
    %1863 = vmatpush2.msra.mxu0 0.0
    %1864 = vmatprep.subr.mxu0 0.0
    %1865 = vmatpush2.msra.mxu0 0.0
    %1866 = vmatprep.subr.mxu0 0.0
    %1867 = vmatpush2.msra.mxu0 0.0
    %1868 = vmatprep.subr.mxu0 0.0
    %1869 = vmatpush2.msra.mxu0 0.0
    %1870 = vmatprep.subr.mxu0 0.0
    %1871 = vmatpush2.msra.mxu0 0.0
    %1872 = vmatprep.subr.mxu0 0.0
    %1873 = vmatpush2.msra.mxu0 0.0
    %1874 = vmatprep.subr.mxu0 0.0
    %1875 = vmatpush2.msra.mxu0 0.0
    %1876 = vmatprep.subr.mxu0 0.0
    %1877 = vmatpush2.msra.mxu0 0.0
    %1878 = vmatprep.subr.mxu0 0.0
    %1879 = vmatpush2.msra.mxu0 0.0
    %1880 = vmatprep.subr.mxu0 0.0
    %1881 = vmatpush2.msra.mxu0 0.0
    %1882 = vmatprep.subr.mxu0 0.0
    %1883 = vmatpush2.msra.mxu0 0.0
    %1884 = vmatprep.subr.mxu0 0.0
    %1885 = vmatpush2.msra.mxu0 0.0
    %1886 = vmatprep.subr.mxu0 0.0
    %1887 = vmatpush2.msra.mxu0 0.0
    %1888 = vmatprep.mubr.f32.mxu0 0.0
    %1889 = vmatmul.mubr.f32.gmra.mxu0 %v1822
    %v1890 = vpop.f32.mrf.mxu0
    %v1891 = vadd.f32 %v1819, %v1890
    %v1892 = vpop.f32.mrf.mxu0
    %1893 = vdwg.mxu0
    %v1894 = vld [vmem:[%s18] sm:$0xf]
    %v1895 = vld [vmem:[%s19] sm:$0x1]
    %v1897 = vlaneseq
    %v1898 = vshrl.u32 %v1897, 7
    %v1899 = vsub.s32 0, %v1898
    %v1900 = vrot.slane %v1895, %v1899
    %vm1902 = vcmask 31744
    %v1904 = vsel %vm1902, %v1891, 0
    %vm1906 = vcmask 1043456
    %v1908 = vsel %vm1906, %v1894, 0
    %1910 = vmatprep.subr.mxu0 0.0
    %1911 = vmatpush1.msra.mxu0 0.0
    %1912 = vmatprep.subr.mxu0 0.0
    %1913 = vmatpush1.msra.mxu0 0.0
    %1914 = vmatprep.subr.mxu0 0.0
    %1915 = vmatpush1.msra.mxu0 0.0
    %1916 = vmatprep.subr.mxu0 0.0
    %1917 = vmatpush1.msra.mxu0 0.0
    %1918 = vmatprep.subr.mxu0 0.0
    %1919 = vmatpush1.msra.mxu0 0.0
    %1920 = vmatprep.subr.mxu0 0.0
    %1921 = vmatpush1.msra.mxu0 0.0
    %1922 = vmatprep.subr.mxu0 0.0
    %1923 = vmatpush1.msra.mxu0 0.0
    %1924 = vmatprep.subr.mxu0 0.0
    %1925 = vmatpush1.msra.mxu0 0.0
    %1926 = vmatprep.subr.mxu0 0.0
    %1927 = vmatpush1.msra.mxu0 0.0
    %1928 = vmatprep.subr.mxu0 0.0
    %1929 = vmatpush1.msra.mxu0 0.0
    %1930 = vmatprep.subr.mxu0 0.0
    %1931 = vmatpush1.msra.mxu0 0.0
    %1932 = vmatprep.subr.mxu0 0.0
    %1933 = vmatpush1.msra.mxu0 0.0
    %1934 = vmatprep.subr.mxu0 0.0
    %1935 = vmatpush1.msra.mxu0 0.0
    %1936 = vmatprep.subr.mxu0 0.0
    %1937 = vmatpush1.msra.mxu0 0.0
    %1938 = vmatprep.subr.mxu0 0.0
    %1939 = vmatpush1.msra.mxu0 0.0
    %1940 = vmatprep.subr.mxu0 0.0
    %1941 = vmatpush1.msra.mxu0 %v1908
    %1942 = vmatprep.subr.mxu0 0.0
    %1943 = vmatpush2.msra.mxu0 0.0
    %1944 = vmatprep.subr.mxu0 0.0
    %1945 = vmatpush2.msra.mxu0 0.0
    %1946 = vmatprep.subr.mxu0 0.0
    %1947 = vmatpush2.msra.mxu0 0.0
    %1948 = vmatprep.subr.mxu0 0.0
    %1949 = vmatpush2.msra.mxu0 0.0
    %1950 = vmatprep.subr.mxu0 0.0
    %1951 = vmatpush2.msra.mxu0 0.0
    %1952 = vmatprep.subr.mxu0 0.0
    %1953 = vmatpush2.msra.mxu0 0.0
    %1954 = vmatprep.subr.mxu0 0.0
    %1955 = vmatpush2.msra.mxu0 0.0
    %1956 = vmatprep.subr.mxu0 0.0
    %1957 = vmatpush2.msra.mxu0 0.0
    %1958 = vmatprep.subr.mxu0 0.0
    %1959 = vmatpush2.msra.mxu0 0.0
    %1960 = vmatprep.subr.mxu0 0.0
    %1961 = vmatpush2.msra.mxu0 0.0
    %1962 = vmatprep.subr.mxu0 0.0
    %1963 = vmatpush2.msra.mxu0 0.0
    %1964 = vmatprep.subr.mxu0 0.0
    %1965 = vmatpush2.msra.mxu0 0.0
    %1966 = vmatprep.subr.mxu0 0.0
    %1967 = vmatpush2.msra.mxu0 0.0
    %1968 = vmatprep.subr.mxu0 0.0
    %1969 = vmatpush2.msra.mxu0 0.0
    %1970 = vmatprep.subr.mxu0 0.0
    %1971 = vmatpush2.msra.mxu0 0.0
    %1972 = vmatprep.subr.mxu0 0.0
    %1973 = vmatpush2.msra.mxu0 0.0
    %1974 = vmatprep.mubr.f32.mxu0 0.0
    %1975 = vmatmul.mubr.f32.gmra.mxu0 %v1904
    %v1976 = vpop.f32.mrf.mxu0
    %v1977 = vadd.f32 %v1900, %v1976
    %v1978 = vpop.f32.mrf.mxu0
    %1979 = vdwg.mxu0
    %vm1980 = vcmask 25600
    %1981 = vst.msk [vmem:[#allocation2] sm:$0x3] %vm1980, %v1977
    // Predicated region
    $region82: #{tpu_custom_call.1} parent=1 // pred_check
      _
    $region83: #{tpu_custom_call.1} parent=1 // pred_check_branch
      %1983 = sbr.rel (0) target = $region85
    $region84: #{tpu_custom_call.1} parent=1 // pred_region
      %s1985 = ssub.s32 32, 32
      %1986 = vsyncadd [#allocation3], %s1985
      %s1988 = sshll.u32 [#allocation2], 4
      %s1989 = int_to_ptr.vmem [resolvable:$true] %s1988
      %1991 = dma.vmem_to_hbm [thread:$0]  %s1989, 32, %s20, [#allocation3]
    $region85: #{tpu_custom_call.1} parent=1 // pred_fallthru
      _
    // Predicated region
    $region86: #{tpu_custom_call.1} parent=1 // pred_check
      _
    $region87: #{tpu_custom_call.1} parent=1 // pred_check_branch
      %1993 = sbr.rel (0) target = $region89
    $region88: #{tpu_custom_call.1} parent=1 // pred_region
      %1994 = dma.done [#allocation3], 32
    $region89: #{tpu_custom_call.1} parent=1 // pred_fallthru
      _
    %1995 = vsyncpa [#allocation3], 1

</llo_original>
